<compile_context>
chip_gen: v5e
topology: v5e:2x2
jax: 0.10.0
libtpu: 0.0.40
codegen_flags: <defaults>
</compile_context>

<pallas_src>
import functools

import numpy as np
import jax
import jax.numpy as jnp
from jax.experimental import pallas as pl
from jax.experimental.pallas import tpu as pltpu

IN_CHANNELS = 9      # args.pc_in_dim
N_POINTS = 128       # args.pc_npts
ENC_DIM = 64         # SPCT "x" channel width
CAT_DIM = 128        # SPCT "x_cat" width (= 64*2, BaseLearner conv input)
SEG_DIM = 64         # BaseLearner conv output
CIN_PAD = 16         # pad Cin 9 -> 16 (one pad channel carries the const 1.0 for bias folding)
P_PAD = 8            # prototype/class axis padded to a full sublane tile


# ----------------------------------------------------------------------------
# Fused kernel: support features -> weighted-mask prototype matmul -> query
# features -> scaled cosine similarity -> per-point argmax.
# ----------------------------------------------------------------------------
def _protonet_kernel(sxT_ref, qx_ref, wmask_ref,
                     w1t_ref, w2t_ref, b2r_ref, wsegt_ref, bsegr_ref,
                     w1_ref, w2_ref, b2c_ref, wseg_ref, bsegc_ref,
                     sim_ref, pred_ref, *, p_cls):
    f32 = jnp.float32
    bf16 = jnp.bfloat16

    # ---- support features, NLC orientation: (NS*L, C) -------------------------
    # conv1 bias is folded into w1 via the constant-1 padded input channel.
    sx = sxT_ref[...]                                                  # bf16 (NS*L, 16)
    h1s = jnp.dot(sx, w1t_ref[...], preferred_element_type=f32)       # encoder "x"
    h1s = jnp.maximum(h1s, 0.0)
    xcs = jnp.dot(h1s.astype(bf16), w2t_ref[...],
                  preferred_element_type=f32) + b2r_ref[...]          # encoder "x_cat"
    xcs = jnp.maximum(xcs, 0.0)
    segs = jnp.dot(xcs.astype(bf16), wsegt_ref[...],
                   preferred_element_type=f32) + bsegr_ref[...]       # BaseLearner (BN folded)
    segs = jnp.maximum(segs, 0.0)

    # ---- prototypes: one weighted-mask MXU matmul per feature half ------------
    wm = wmask_ref[...]                                                # f32 (P_PAD, NS*L)
    pa = jnp.dot(wm, h1s, preferred_element_type=f32)                  # (P_PAD, 64)
    pb = jnp.dot(wm, segs, preferred_element_type=f32)                 # (P_PAD, 64)

    # fold prototype norms (and the x10 cosine scaler) into the prototypes
    psq = (jnp.sum(pa * pa, axis=1, keepdims=True)
           + jnp.sum(pb * pb, axis=1, keepdims=True))                  # (P_PAD, 1)
    pscale = 10.0 * jax.lax.rsqrt(jnp.maximum(psq, 1e-16))             # 10 / max(||p||, 1e-8)
    pa = pa * pscale
    pb = pb * pscale

    # ---- query features, NCL orientation: (C, NQ*L) ---------------------------
    qx = qx_ref[...]                                                   # bf16 (16, NQ*L)
    h1q = jnp.dot(w1_ref[...], qx, preferred_element_type=f32)
    h1q = jnp.maximum(h1q, 0.0)
    xcq = jnp.dot(w2_ref[...], h1q.astype(bf16),
                  preferred_element_type=f32) + b2c_ref[...]
    xcq = jnp.maximum(xcq, 0.0)
    segq = jnp.dot(wseg_ref[...], xcq.astype(bf16),
                   preferred_element_type=f32) + bsegc_ref[...]
    segq = jnp.maximum(segq, 0.0)

    # ---- scaled cosine similarity against all prototypes ----------------------
    dots = (jnp.dot(pa, h1q, preferred_element_type=f32)
            + jnp.dot(pb, segq, preferred_element_type=f32))           # (P_PAD, NQ*L)
    fsq = (jnp.sum(h1q * h1q, axis=0, keepdims=True)
           + jnp.sum(segq * segq, axis=0, keepdims=True))              # (1, NQ*L)
    sims = dots * jax.lax.rsqrt(jnp.maximum(fsq, 1e-16))               # 1 / max(||f||, 1e-8)
    sim_ref[...] = sims                                                # dense (8, NQ*L) store

    # ---- per-point class argmax (softmax is monotone -> same argmax) ----------
    best = sims[0:1, :]
    idx = jnp.zeros(best.shape, jnp.int32)
    for c in range(1, p_cls):
        v = sims[c:c + 1, :]
        gt = v > best
        best = jnp.where(gt, v, best)
        idx = jnp.where(gt, c, idx)
    pred_ref[...] = idx


# ----------------------------------------------------------------------------
# Wrapper: builds batched/packed inputs, weighted-mask tensor, calls the kernel.
# ----------------------------------------------------------------------------
def protonet_spct_forward(params, support_x, support_y, query_x, query_y,
                          *, n_way, k_shot):
    """
    support_x: (n_way, k_shot, Cin, L), support_y: (n_way, k_shot, L) bool
    query_x:   (n_queries, Cin, L),     query_y:   (n_queries, L) int (unused: loss omitted)
    returns query_pred (raw scaled-cosine logits, as the module returns):
      (n_queries, n_way+1, L), and pred_choice: (n_queries, L) int32
    """
    _, _, cin, L = support_x.shape
    ns = n_way * k_shot
    nq = query_x.shape[0]
    p_cls = n_way + 1
    assert p_cls <= P_PAD

    # channel pad 9 -> 16; pad channel `cin` is constant 1.0 so conv1 bias folds into w1.
    def pad_channels(x):                                # (B, cin, L) -> (B, CIN_PAD, L)
        b = x.shape[0]
        ones = jnp.ones((b, 1, L), x.dtype)
        zeros = jnp.zeros((b, CIN_PAD - cin - 1, L), x.dtype)
        return jnp.concatenate([x, ones, zeros], axis=1)

    sx = pad_channels(support_x.reshape(ns, cin, L).astype(jnp.float32))
    qx = pad_channels(query_x.astype(jnp.float32))

    sxT = sx.transpose(0, 2, 1).reshape(ns * L, CIN_PAD).astype(jnp.bfloat16)   # (NS*L, 16)
    qxN = qx.transpose(1, 0, 2).reshape(CIN_PAD, nq * L).astype(jnp.bfloat16)   # (16, NQ*L)

    # Weighted pooling + prototype-combination mask (P_PAD, NS*L):
    #   row 0            = (1-fg)/(sum(1-fg)+1e-5)/ns        -> background prototype
    #   row (way+1)      = fg/(sum(fg)+1e-5)/k_shot  (only for that way's shots)
    fg = support_y.reshape(ns, L).astype(jnp.float32)
    bg = 1.0 - fg
    fg_w = fg / (jnp.sum(fg, axis=1, keepdims=True) + 1e-5) / k_shot
    bg_w = bg / (jnp.sum(bg, axis=1, keepdims=True) + 1e-5) / ns
    way_of_shot = np.arange(ns) // k_shot
    rows = [bg_w]
    for w in range(n_way):
        sel = jnp.asarray((way_of_shot == w).astype(np.float32))[:, None]       # (NS, 1)
        rows.append(fg_w * sel)
    rows.extend([jnp.zeros_like(fg_w)] * (P_PAD - p_cls))
    wmask = jnp.stack(rows, axis=0).reshape(P_PAD, ns * L)                       # f32

    # Fold conv1 bias into w1 (const-1 channel) and BatchNorm into the seg conv.
    w1f = jnp.concatenate(
        [params["w1"], params["b1"],
         jnp.zeros((ENC_DIM, CIN_PAD - cin - 1), jnp.float32)], axis=1)          # (64, 16)
    wseg_f = params["bn_scale"] * params["wseg"]                                 # (64, 128)
    bseg_f = params["bn_scale"] * params["bseg"] + params["bn_shift"]            # (64, 1)

    bf = lambda a: a.astype(jnp.bfloat16)
    w1, w1t = bf(w1f), bf(w1f.T)
    w2, w2t = bf(params["w2"]), bf(params["w2"].T)
    wseg, wsegt = bf(wseg_f), bf(wseg_f.T)
    b2c, b2r = params["b2"], params["b2"].T                                      # (128,1) / (1,128)
    bsegc, bsegr = bseg_f, bseg_f.T                                              # (64,1)  / (1,64)

    def full(shape):
        return pl.BlockSpec(shape, lambda i: (0,) * len(shape))

    kernel = functools.partial(_protonet_kernel, p_cls=p_cls)
    sims, pred = pl.pallas_call(
        kernel,
        out_shape=(jax.ShapeDtypeStruct((P_PAD, nq * L), jnp.float32),
                   jax.ShapeDtypeStruct((1, nq * L), jnp.int32)),
        grid=(1,),
        in_specs=[
            full((ns * L, CIN_PAD)),                      # sxT
            full((CIN_PAD, nq * L)),                      # qxN
            full((P_PAD, ns * L)),                        # wmask
            full((CIN_PAD, ENC_DIM)),                     # w1t
            full((ENC_DIM, CAT_DIM)), full((1, CAT_DIM)), # w2t, b2r
            full((CAT_DIM, SEG_DIM)), full((1, SEG_DIM)), # wsegt, bsegr
            full((ENC_DIM, CIN_PAD)),                     # w1
            full((CAT_DIM, ENC_DIM)), full((CAT_DIM, 1)), # w2, b2c
            full((SEG_DIM, CAT_DIM)), full((SEG_DIM, 1)), # wseg, bsegc
        ],
        out_specs=(full((P_PAD, nq * L)), full((1, nq * L))),
        compiler_params=pltpu.CompilerParams(dimension_semantics=("arbitrary",)),
    )(sxT, qxN, wmask, w1t, w2t, b2r, wsegt, bsegr, w1, w2, b2c, wseg, bsegc)

    query_pred = sims[:p_cls].reshape(p_cls, nq, L).transpose(1, 0, 2)  # (NQ, P, L) logits
    pred_choice = pred.reshape(nq, L)
    # TODO(synk): focal+dice loss (PointNetSegLoss) not provided -> not computed.
    return query_pred, pred_choice


# ----------------------------------------------------------------------------
# Deterministic parameter init (synthetic; shapes from the module __init__),
# W is (Cout, Cin); biases / BN params are (C, 1).
# ----------------------------------------------------------------------------
def init_params(key):
    ks = jax.random.split(key, 8)

    def w(k, shape, fan_in):
        return jax.random.normal(k, shape, jnp.float32) / jnp.sqrt(jnp.float32(fan_in))

    w1 = w(ks[0], (ENC_DIM, IN_CHANNELS), IN_CHANNELS)
    b1 = jnp.zeros((ENC_DIM, 1), jnp.float32)
    w2 = w(ks[1], (CAT_DIM, ENC_DIM), ENC_DIM)
    b2 = jnp.zeros((CAT_DIM, 1), jnp.float32)
    # BaseLearner: Conv1d(128, 64, 1) + BatchNorm1d(64) (eval-mode, folded in wrapper)
    wseg = w(ks[2], (SEG_DIM, CAT_DIM), CAT_DIM)
    bseg = 0.01 * jax.random.normal(ks[3], (SEG_DIM, 1), jnp.float32)
    gamma = 1.0 + 0.1 * jax.random.normal(ks[4], (SEG_DIM, 1), jnp.float32)
    beta = 0.1 * jax.random.normal(ks[5], (SEG_DIM, 1), jnp.float32)
    r_mean = 0.1 * jax.random.normal(ks[6], (SEG_DIM, 1), jnp.float32)
    r_var = 1.0 + 0.1 * jnp.abs(jax.random.normal(ks[7], (SEG_DIM, 1), jnp.float32))
    bn_scale = gamma / jnp.sqrt(r_var + 1e-5)
    bn_shift = beta - r_mean * bn_scale
    return dict(w1=w1, b1=b1, w2=w2, b2=b2, wseg=wseg, bseg=bseg,
                bn_scale=bn_scale, bn_shift=bn_shift)


if __name__ == "__main__":
    key = jax.random.PRNGKey(0)
    n_way, k_shot, n_queries = 2, 2, 2
    Cin, L = IN_CHANNELS, N_POINTS

    keys = jax.random.split(key, 5)
    support_x = jax.random.normal(keys[0], (n_way, k_shot, Cin, L), jnp.float32)
    support_y = jax.random.uniform(keys[1], (n_way, k_shot, L)) > 0.5   # bool fg mask
    query_x = jax.random.normal(keys[2], (n_queries, Cin, L), jnp.float32)
    query_y = jax.random.randint(keys[3], (n_queries, L), 0, n_way + 1)

    params = init_params(keys[4])

    fwd = jax.jit(functools.partial(protonet_spct_forward, n_way=n_way, k_shot=k_shot))
    query_pred, pred_choice = fwd(params, support_x, support_y, query_x, query_y)
    jax.block_until_ready(query_pred)
    jax.block_until_ready(pred_choice)

    assert query_pred.shape == (n_queries, n_way + 1, L), query_pred.shape
    assert pred_choice.shape == (n_queries, L), pred_choice.shape
    assert bool(jnp.all(jnp.isfinite(query_pred)))
    assert bool(jnp.all((pred_choice >= 0) & (pred_choice <= n_way)))
    print("KERNEL_OK")
</pallas_src>

<mosaic_0001>
module attributes {stable_mosaic.version = 11 : i64} {
  func.func @_protonet_kernel(%arg0: i32, %arg1: memref<512x16xbf16, #tpu.memory_space<vmem>>, %arg2: memref<16x256xbf16, #tpu.memory_space<vmem>>, %arg3: memref<8x512xf32, #tpu.memory_space<vmem>>, %arg4: memref<16x64xbf16, #tpu.memory_space<vmem>>, %arg5: memref<64x128xbf16, #tpu.memory_space<vmem>>, %arg6: memref<1x128xf32, #tpu.memory_space<vmem>>, %arg7: memref<128x64xbf16, #tpu.memory_space<vmem>>, %arg8: memref<1x64xf32, #tpu.memory_space<vmem>>, %arg9: memref<64x16xbf16, #tpu.memory_space<vmem>>, %arg10: memref<128x64xbf16, #tpu.memory_space<vmem>>, %arg11: memref<128x1xf32, #tpu.memory_space<vmem>>, %arg12: memref<64x128xbf16, #tpu.memory_space<vmem>>, %arg13: memref<64x1xf32, #tpu.memory_space<vmem>>, %arg14: memref<8x256xf32, #tpu.memory_space<vmem>>, %arg15: memref<1x256xi32, #tpu.memory_space<vmem>>) attributes {dimension_semantics = [#tpu.dimension_semantics<arbitrary>], iteration_bounds = array<i64: 1>, scalar_prefetch = 0 : i64, scratch_operands = 0 : i64, tpu.core_type = #tpu.core_type<tc>, window_params = [{pipeline_mode = #tpu.pipeline_mode<synchronous>, transform_indices = @transform_0, window_bounds = array<i64: 512, 16>}, {pipeline_mode = #tpu.pipeline_mode<synchronous>, transform_indices = @transform_1, window_bounds = array<i64: 16, 256>}, {pipeline_mode = #tpu.pipeline_mode<synchronous>, transform_indices = @transform_2, window_bounds = array<i64: 8, 512>}, {pipeline_mode = #tpu.pipeline_mode<synchronous>, transform_indices = @transform_3, window_bounds = array<i64: 16, 64>}, {pipeline_mode = #tpu.pipeline_mode<synchronous>, transform_indices = @transform_4, window_bounds = array<i64: 64, 128>}, {pipeline_mode = #tpu.pipeline_mode<synchronous>, transform_indices = @transform_5, window_bounds = array<i64: 1, 128>}, {pipeline_mode = #tpu.pipeline_mode<synchronous>, transform_indices = @transform_6, window_bounds = array<i64: 128, 64>}, {pipeline_mode = #tpu.pipeline_mode<synchronous>, transform_indices = @transform_7, window_bounds = array<i64: 1, 64>}, {pipeline_mode = #tpu.pipeline_mode<synchronous>, transform_indices = @transform_8, window_bounds = array<i64: 64, 16>}, {pipeline_mode = #tpu.pipeline_mode<synchronous>, transform_indices = @transform_9, window_bounds = array<i64: 128, 64>}, {pipeline_mode = #tpu.pipeline_mode<synchronous>, transform_indices = @transform_10, window_bounds = array<i64: 128, 1>}, {pipeline_mode = #tpu.pipeline_mode<synchronous>, transform_indices = @transform_11, window_bounds = array<i64: 64, 128>}, {pipeline_mode = #tpu.pipeline_mode<synchronous>, transform_indices = @transform_12, window_bounds = array<i64: 64, 1>}, {pipeline_mode = #tpu.pipeline_mode<synchronous>, transform_indices = @transform_13, window_bounds = array<i64: 8, 256>}, {pipeline_mode = #tpu.pipeline_mode<synchronous>, transform_indices = @transform_14, window_bounds = array<i64: 1, 256>}]} {
    %c0 = arith.constant 0 : index
    %c0_0 = arith.constant 0 : index
    %0 = vector.load %arg1[%c0, %c0_0] : memref<512x16xbf16, #tpu.memory_space<vmem>>, vector<512x16xbf16>
    %c0_1 = arith.constant 0 : index
    %c0_2 = arith.constant 0 : index
    %1 = vector.load %arg4[%c0_1, %c0_2] : memref<16x64xbf16, #tpu.memory_space<vmem>>, vector<16x64xbf16>
    %cst = arith.constant dense<0.000000e+00> : vector<512x64xf32>
    %2 = tpu.matmul %0, %1, %cst {dimension_numbers = #tpu.dot_dimension_numbers<[1], [0], [0], [1], [0, 0, 1, 1], [], []>} : vector<512x16xbf16>, vector<16x64xbf16>, vector<512x64xf32> -> vector<512x64xf32>
    %cst_3 = arith.constant 0.000000e+00 : f32
    %3 = vector.broadcast %cst_3 : f32 to vector<512x64xf32>
    %4 = arith.maximumf %2, %3 : vector<512x64xf32>
    %5 = arith.truncf %4 : vector<512x64xf32> to vector<512x64xbf16>
    %c0_4 = arith.constant 0 : index
    %c0_5 = arith.constant 0 : index
    %6 = vector.load %arg5[%c0_4, %c0_5] : memref<64x128xbf16, #tpu.memory_space<vmem>>, vector<64x128xbf16>
    %cst_6 = arith.constant dense<0.000000e+00> : vector<512x128xf32>
    %7 = tpu.matmul %5, %6, %cst_6 {dimension_numbers = #tpu.dot_dimension_numbers<[1], [0], [0], [1], [0, 0, 1, 1], [], []>} : vector<512x64xbf16>, vector<64x128xbf16>, vector<512x128xf32> -> vector<512x128xf32>
    %c0_7 = arith.constant 0 : index
    %c0_8 = arith.constant 0 : index
    %8 = vector.load %arg6[%c0_7, %c0_8] : memref<1x128xf32, #tpu.memory_space<vmem>>, vector<1x128xf32>
    %9 = vector.broadcast %8 : vector<1x128xf32> to vector<512x128xf32>
    %10 = arith.addf %7, %9 : vector<512x128xf32>
    %cst_9 = arith.constant 0.000000e+00 : f32
    %11 = vector.broadcast %cst_9 : f32 to vector<512x128xf32>
    %12 = arith.maximumf %10, %11 : vector<512x128xf32>
    %13 = arith.truncf %12 : vector<512x128xf32> to vector<512x128xbf16>
    %c0_10 = arith.constant 0 : index
    %c0_11 = arith.constant 0 : index
    %14 = vector.load %arg7[%c0_10, %c0_11] : memref<128x64xbf16, #tpu.memory_space<vmem>>, vector<128x64xbf16>
    %cst_12 = arith.constant dense<0.000000e+00> : vector<512x64xf32>
    %15 = tpu.matmul %13, %14, %cst_12 {dimension_numbers = #tpu.dot_dimension_numbers<[1], [0], [0], [1], [0, 0, 1, 1], [], []>} : vector<512x128xbf16>, vector<128x64xbf16>, vector<512x64xf32> -> vector<512x64xf32>
    %c0_13 = arith.constant 0 : index
    %c0_14 = arith.constant 0 : index
    %16 = vector.load %arg8[%c0_13, %c0_14] : memref<1x64xf32, #tpu.memory_space<vmem>>, vector<1x64xf32>
    %17 = vector.broadcast %16 : vector<1x64xf32> to vector<512x64xf32>
    %18 = arith.addf %15, %17 : vector<512x64xf32>
    %cst_15 = arith.constant 0.000000e+00 : f32
    %19 = vector.broadcast %cst_15 : f32 to vector<512x64xf32>
    %20 = arith.maximumf %18, %19 : vector<512x64xf32>
    %c0_16 = arith.constant 0 : index
    %c0_17 = arith.constant 0 : index
    %21 = vector.load %arg3[%c0_16, %c0_17] : memref<8x512xf32, #tpu.memory_space<vmem>>, vector<8x512xf32>
    %cst_18 = arith.constant dense<0.000000e+00> : vector<8x64xf32>
    %22 = tpu.matmul %21, %4, %cst_18 {dimension_numbers = #tpu.dot_dimension_numbers<[1], [0], [0], [1], [0, 0, 1, 1], [], []>} : vector<8x512xf32>, vector<512x64xf32>, vector<8x64xf32> -> vector<8x64xf32>
    %cst_19 = arith.constant dense<0.000000e+00> : vector<8x64xf32>
    %23 = tpu.matmul %21, %20, %cst_19 {dimension_numbers = #tpu.dot_dimension_numbers<[1], [0], [0], [1], [0, 0, 1, 1], [], []>} : vector<8x512xf32>, vector<512x64xf32>, vector<8x64xf32> -> vector<8x64xf32>
    %24 = arith.mulf %22, %22 : vector<8x64xf32>
    %cst_20 = arith.constant dense<0.000000e+00> : vector<8xf32>
    %25 = vector.multi_reduction <add>, %24, %cst_20 [1] : vector<8x64xf32> to vector<8xf32>
    %26 = vector.shape_cast %25 : vector<8xf32> to vector<8x1xf32>
    %27 = arith.mulf %23, %23 : vector<8x64xf32>
    %cst_21 = arith.constant dense<0.000000e+00> : vector<8xf32>
    %28 = vector.multi_reduction <add>, %27, %cst_21 [1] : vector<8x64xf32> to vector<8xf32>
    %29 = vector.shape_cast %28 : vector<8xf32> to vector<8x1xf32>
    %30 = arith.addf %26, %29 : vector<8x1xf32>
    %cst_22 = arith.constant 1.000000e-16 : f32
    %31 = vector.broadcast %cst_22 : f32 to vector<8x1xf32>
    %32 = arith.maximumf %30, %31 : vector<8x1xf32>
    %33 = math.rsqrt %32 : vector<8x1xf32>
    %cst_23 = arith.constant 1.000000e+01 : f32
    %34 = vector.broadcast %cst_23 : f32 to vector<8x1xf32>
    %35 = arith.mulf %34, %33 : vector<8x1xf32>
    %36 = vector.broadcast %35 : vector<8x1xf32> to vector<8x64xf32>
    %37 = arith.mulf %22, %36 : vector<8x64xf32>
    %38 = vector.broadcast %35 : vector<8x1xf32> to vector<8x64xf32>
    %39 = arith.mulf %23, %38 : vector<8x64xf32>
    %c0_24 = arith.constant 0 : index
    %c0_25 = arith.constant 0 : index
    %40 = vector.load %arg2[%c0_24, %c0_25] : memref<16x256xbf16, #tpu.memory_space<vmem>>, vector<16x256xbf16>
    %c0_26 = arith.constant 0 : index
    %c0_27 = arith.constant 0 : index
    %41 = vector.load %arg9[%c0_26, %c0_27] : memref<64x16xbf16, #tpu.memory_space<vmem>>, vector<64x16xbf16>
    %cst_28 = arith.constant dense<0.000000e+00> : vector<64x256xf32>
    %42 = tpu.matmul %41, %40, %cst_28 {dimension_numbers = #tpu.dot_dimension_numbers<[1], [0], [0], [1], [0, 0, 1, 1], [], []>} : vector<64x16xbf16>, vector<16x256xbf16>, vector<64x256xf32> -> vector<64x256xf32>
    %cst_29 = arith.constant 0.000000e+00 : f32
    %43 = vector.broadcast %cst_29 : f32 to vector<64x256xf32>
    %44 = arith.maximumf %42, %43 : vector<64x256xf32>
    %c0_30 = arith.constant 0 : index
    %c0_31 = arith.constant 0 : index
    %45 = vector.load %arg10[%c0_30, %c0_31] : memref<128x64xbf16, #tpu.memory_space<vmem>>, vector<128x64xbf16>
    %46 = arith.truncf %44 : vector<64x256xf32> to vector<64x256xbf16>
    %cst_32 = arith.constant dense<0.000000e+00> : vector<128x256xf32>
    %47 = tpu.matmul %45, %46, %cst_32 {dimension_numbers = #tpu.dot_dimension_numbers<[1], [0], [0], [1], [0, 0, 1, 1], [], []>} : vector<128x64xbf16>, vector<64x256xbf16>, vector<128x256xf32> -> vector<128x256xf32>
    %c0_33 = arith.constant 0 : index
    %c0_34 = arith.constant 0 : index
    %48 = vector.load %arg11[%c0_33, %c0_34] : memref<128x1xf32, #tpu.memory_space<vmem>>, vector<128x1xf32>
    %49 = vector.broadcast %48 : vector<128x1xf32> to vector<128x256xf32>
    %50 = arith.addf %47, %49 : vector<128x256xf32>
    %cst_35 = arith.constant 0.000000e+00 : f32
    %51 = vector.broadcast %cst_35 : f32 to vector<128x256xf32>
    %52 = arith.maximumf %50, %51 : vector<128x256xf32>
    %c0_36 = arith.constant 0 : index
    %c0_37 = arith.constant 0 : index
    %53 = vector.load %arg12[%c0_36, %c0_37] : memref<64x128xbf16, #tpu.memory_space<vmem>>, vector<64x128xbf16>
    %54 = arith.truncf %52 : vector<128x256xf32> to vector<128x256xbf16>
    %cst_38 = arith.constant dense<0.000000e+00> : vector<64x256xf32>
    %55 = tpu.matmul %53, %54, %cst_38 {dimension_numbers = #tpu.dot_dimension_numbers<[1], [0], [0], [1], [0, 0, 1, 1], [], []>} : vector<64x128xbf16>, vector<128x256xbf16>, vector<64x256xf32> -> vector<64x256xf32>
    %c0_39 = arith.constant 0 : index
    %c0_40 = arith.constant 0 : index
    %56 = vector.load %arg13[%c0_39, %c0_40] : memref<64x1xf32, #tpu.memory_space<vmem>>, vector<64x1xf32>
    %57 = vector.broadcast %56 : vector<64x1xf32> to vector<64x256xf32>
    %58 = arith.addf %55, %57 : vector<64x256xf32>
    %cst_41 = arith.constant 0.000000e+00 : f32
    %59 = vector.broadcast %cst_41 : f32 to vector<64x256xf32>
    %60 = arith.maximumf %58, %59 : vector<64x256xf32>
    %cst_42 = arith.constant dense<0.000000e+00> : vector<8x256xf32>
    %61 = tpu.matmul %37, %44, %cst_42 {dimension_numbers = #tpu.dot_dimension_numbers<[1], [0], [0], [1], [0, 0, 1, 1], [], []>} : vector<8x64xf32>, vector<64x256xf32>, vector<8x256xf32> -> vector<8x256xf32>
    %cst_43 = arith.constant dense<0.000000e+00> : vector<8x256xf32>
    %62 = tpu.matmul %39, %60, %cst_43 {dimension_numbers = #tpu.dot_dimension_numbers<[1], [0], [0], [1], [0, 0, 1, 1], [], []>} : vector<8x64xf32>, vector<64x256xf32>, vector<8x256xf32> -> vector<8x256xf32>
    %63 = arith.addf %61, %62 : vector<8x256xf32>
    %64 = arith.mulf %44, %44 : vector<64x256xf32>
    %cst_44 = arith.constant dense<0.000000e+00> : vector<256xf32>
    %65 = vector.multi_reduction <add>, %64, %cst_44 [0] : vector<64x256xf32> to vector<256xf32>
    %66 = vector.shape_cast %65 : vector<256xf32> to vector<1x256xf32>
    %67 = arith.mulf %60, %60 : vector<64x256xf32>
    %cst_45 = arith.constant dense<0.000000e+00> : vector<256xf32>
    %68 = vector.multi_reduction <add>, %67, %cst_45 [0] : vector<64x256xf32> to vector<256xf32>
    %69 = vector.shape_cast %68 : vector<256xf32> to vector<1x256xf32>
    %70 = arith.addf %66, %69 : vector<1x256xf32>
    %cst_46 = arith.constant 1.000000e-16 : f32
    %71 = vector.broadcast %cst_46 : f32 to vector<1x256xf32>
    %72 = arith.maximumf %70, %71 : vector<1x256xf32>
    %73 = math.rsqrt %72 : vector<1x256xf32>
    %74 = vector.broadcast %73 : vector<1x256xf32> to vector<8x256xf32>
    %75 = arith.mulf %63, %74 : vector<8x256xf32>
    %c0_47 = arith.constant 0 : index
    %c0_48 = arith.constant 0 : index
    %76 = vector.load %arg14[%c0_47, %c0_48] : memref<8x256xf32, #tpu.memory_space<vmem>>, vector<8x256xf32>
    tpu.vector_store %arg14[%c0_47, %c0_48], %75 {strides = array<i32>} : memref<8x256xf32, #tpu.memory_space<vmem>>, vector<8x256xf32>,
    %77 = vector.extract_strided_slice %75 {offsets = [0, 0], sizes = [1, 256], strides = [1, 1]} : vector<8x256xf32> to vector<1x256xf32>
    %c0_i32 = arith.constant 0 : i32
    %78 = vector.broadcast %c0_i32 : i32 to vector<1x256xi32>
    %79 = vector.extract_strided_slice %75 {offsets = [1, 0], sizes = [1, 256], strides = [1, 1]} : vector<8x256xf32> to vector<1x256xf32>
    %80 = arith.cmpf ogt, %79, %77 : vector<1x256xf32>
    %81 = arith.select %80, %79, %77 : vector<1x256xi1>, vector<1x256xf32>
    %c1_i32 = arith.constant 1 : i32
    %82 = vector.broadcast %c1_i32 : i32 to vector<1x256xi32>
    %83 = arith.select %80, %82, %78 : vector<1x256xi1>, vector<1x256xi32>
    %84 = vector.extract_strided_slice %75 {offsets = [2, 0], sizes = [1, 256], strides = [1, 1]} : vector<8x256xf32> to vector<1x256xf32>
    %85 = arith.cmpf ogt, %84, %81 : vector<1x256xf32>
    %c2_i32 = arith.constant 2 : i32
    %86 = vector.broadcast %c2_i32 : i32 to vector<1x256xi32>
    %87 = arith.select %85, %86, %83 : vector<1x256xi1>, vector<1x256xi32>
    %c0_49 = arith.constant 0 : index
    %c0_50 = arith.constant 0 : index
    %88 = vector.load %arg15[%c0_49, %c0_50] : memref<1x256xi32, #tpu.memory_space<vmem>>, vector<1x256xi32>
    tpu.vector_store %arg15[%c0_49, %c0_50], %87 {strides = array<i32>} : memref<1x256xi32, #tpu.memory_space<vmem>>, vector<1x256xi32>,
    return
  }
  func.func @transform_0(%arg0: i32) -> (i32, i32) {
    %c0_i32 = arith.constant 0 : i32
    %c0_i32_0 = arith.constant 0 : i32
    %c0_i32_1 = arith.constant 0 : i32
    return %c0_i32, %c0_i32_0 : i32, i32
  }
  func.func @transform_1(%arg0: i32) -> (i32, i32) {
    %c0_i32 = arith.constant 0 : i32
    %c0_i32_0 = arith.constant 0 : i32
    %c0_i32_1 = arith.constant 0 : i32
    return %c0_i32, %c0_i32_0 : i32, i32
  }
  func.func @transform_2(%arg0: i32) -> (i32, i32) {
    %c0_i32 = arith.constant 0 : i32
    %c0_i32_0 = arith.constant 0 : i32
    %c0_i32_1 = arith.constant 0 : i32
    return %c0_i32, %c0_i32_0 : i32, i32
  }
  func.func @transform_3(%arg0: i32) -> (i32, i32) {
    %c0_i32 = arith.constant 0 : i32
    %c0_i32_0 = arith.constant 0 : i32
    %c0_i32_1 = arith.constant 0 : i32
    return %c0_i32, %c0_i32_0 : i32, i32
  }
  func.func @transform_4(%arg0: i32) -> (i32, i32) {
    %c0_i32 = arith.constant 0 : i32
    %c0_i32_0 = arith.constant 0 : i32
    %c0_i32_1 = arith.constant 0 : i32
    return %c0_i32, %c0_i32_0 : i32, i32
  }
  func.func @transform_5(%arg0: i32) -> (i32, i32) {
    %c0_i32 = arith.constant 0 : i32
    %c0_i32_0 = arith.constant 0 : i32
    %c0_i32_1 = arith.constant 0 : i32
    return %c0_i32, %c0_i32_0 : i32, i32
  }
  func.func @transform_6(%arg0: i32) -> (i32, i32) {
    %c0_i32 = arith.constant 0 : i32
    %c0_i32_0 = arith.constant 0 : i32
    %c0_i32_1 = arith.constant 0 : i32
    return %c0_i32, %c0_i32_0 : i32, i32
  }
  func.func @transform_7(%arg0: i32) -> (i32, i32) {
    %c0_i32 = arith.constant 0 : i32
    %c0_i32_0 = arith.constant 0 : i32
    %c0_i32_1 = arith.constant 0 : i32
    return %c0_i32, %c0_i32_0 : i32, i32
  }
  func.func @transform_8(%arg0: i32) -> (i32, i32) {
    %c0_i32 = arith.constant 0 : i32
    %c0_i32_0 = arith.constant 0 : i32
    %c0_i32_1 = arith.constant 0 : i32
    return %c0_i32, %c0_i32_0 : i32, i32
  }
  func.func @transform_9(%arg0: i32) -> (i32, i32) {
    %c0_i32 = arith.constant 0 : i32
    %c0_i32_0 = arith.constant 0 : i32
    %c0_i32_1 = arith.constant 0 : i32
    return %c0_i32, %c0_i32_0 : i32, i32
  }
  func.func @transform_10(%arg0: i32) -> (i32, i32) {
    %c0_i32 = arith.constant 0 : i32
    %c0_i32_0 = arith.constant 0 : i32
    %c0_i32_1 = arith.constant 0 : i32
    return %c0_i32, %c0_i32_0 : i32, i32
  }
  func.func @transform_11(%arg0: i32) -> (i32, i32) {
    %c0_i32 = arith.constant 0 : i32
    %c0_i32_0 = arith.constant 0 : i32
    %c0_i32_1 = arith.constant 0 : i32
    return %c0_i32, %c0_i32_0 : i32, i32
  }
  func.func @transform_12(%arg0: i32) -> (i32, i32) {
    %c0_i32 = arith.constant 0 : i32
    %c0_i32_0 = arith.constant 0 : i32
    %c0_i32_1 = arith.constant 0 : i32
    return %c0_i32, %c0_i32_0 : i32, i32
  }
  func.func @transform_13(%arg0: i32) -> (i32, i32) {
    %c0_i32 = arith.constant 0 : i32
    %c0_i32_0 = arith.constant 0 : i32
    %c0_i32_1 = arith.constant 0 : i32
    return %c0_i32, %c0_i32_0 : i32, i32
  }
  func.func @transform_14(%arg0: i32) -> (i32, i32) {
    %c0_i32 = arith.constant 0 : i32
    %c0_i32_0 = arith.constant 0 : i32
    %c0_i32_1 = arith.constant 0 : i32
    return %c0_i32, %c0_i32_0 : i32, i32
  }
}

</mosaic_0001>

<llo_original>
// kernel: mul.25
$region0: #{mul.25}
  #allocation0 [shape = 's32[1]{0}', space=sflag, size = 0x4, scoped, tag = 'scoped memory for mul.25']
  %s0 = inlined_call_operand.vmem [shape: f32[64,1], index: 0, kind: input, shape index: {}]
  %s1 = inlined_call_operand.vmem [shape: f32[64,1], index: 1, kind: input, shape index: {}]
  %s2 = inlined_call_operand.vmem [shape: f32[64,1], index: 2, kind: output, shape index: {}]
  %v3 = vld [vmem:[%s0] sm:$0x1]
  %v4 = vld [vmem:[%s1] sm:$0x1]
  %5 = xla_tuple %v3, %v4
  %6 = xla_tuple %5
  %v7 = vmul.f32 %v3, %v4
  %8 = xla_tuple %v7
  %9 = vst [vmem:[%s2] sm:$0x1] %v7

// kernel: protonet_spct_forward.1
$region0: #{protonet_spct_forward.1}
  #allocation0 [shape = 'u32[]', space=smem, size = 0x4, offset = 0x4, fixed_abs, tag = 'smem constant byte address 0x4 - core index']
  #allocation1 [shape = 'u32[72,128]{1,0:T(1,128)}', space=vmem, size = 0x9000, scoped, tag = 'internal scratch']
  %s0 = inlined_call_operand.vmem [shape: bf16[512,16], index: 0, kind: input, shape index: {}]
  %s1 = inlined_call_operand.vmem [shape: bf16[16,256], index: 1, kind: input, shape index: {}]
  %s2 = inlined_call_operand.vmem [shape: f32[8,512], index: 2, kind: input, shape index: {}]
  %s3 = inlined_call_operand.vmem [shape: bf16[16,64], index: 3, kind: input, shape index: {}]
  %s4 = inlined_call_operand.vmem [shape: bf16[64,128], index: 4, kind: input, shape index: {}]
  %s5 = inlined_call_operand.vmem [shape: f32[1,128], index: 5, kind: input, shape index: {}]
  %s6 = inlined_call_operand.vmem [shape: bf16[128,64], index: 6, kind: input, shape index: {}]
  %s7 = inlined_call_operand.vmem [shape: f32[1,64], index: 7, kind: input, shape index: {}]
  %s8 = inlined_call_operand.vmem [shape: bf16[64,16], index: 8, kind: input, shape index: {}]
  %s9 = inlined_call_operand.vmem [shape: bf16[128,64], index: 9, kind: input, shape index: {}]
  %s10 = inlined_call_operand.vmem [shape: f32[128,1], index: 10, kind: input, shape index: {}]
  %s11 = inlined_call_operand.vmem [shape: bf16[64,128], index: 11, kind: input, shape index: {}]
  %s12 = inlined_call_operand.vmem [shape: f32[64,1], index: 12, kind: input, shape index: {}]
  %s13 = inlined_call_operand.vmem [shape: f32[8,256], index: 13, kind: output, shape index: {0}]
  %s14 = inlined_call_operand.hbm [shape: s32[1,256], index: 14, kind: output, shape index: {1}]
  %15 = xla_tuple %s13, %s14
  %s16 = sld [smem:[#allocation0]]
  $region70: #{protonet_spct_forward.1} parent=0
    _
  %s18 = ssub.s32 1, %s16
  %s19 = scalar_select 0, %s18, %s16
  $region1: #{protonet_spct_forward.1} parent=0
    #allocation2 [shape = 'u8[1024]{0}', space=vmem, size = 0x400, scoped, tag = 'output window, operand 1, single buffered']
    #allocation3 [shape = 's32[1]{0}', space=sflag, size = 0x4, scoped, tag = 'scoped memory for protonet_spct_forward.1']
    %20 = vsyncpa [#allocation3], 0
    // Predicated region
    $region2: #{protonet_spct_forward.1} parent=1 // pred_check
      _
    $region3: #{protonet_spct_forward.1} parent=1 // pred_check_branch
      %22 = sbr.rel (0) target = $region5
    $region4: #{protonet_spct_forward.1} parent=1 // pred_region
      _
    $region5: #{protonet_spct_forward.1} parent=1 // pred_fallthru
      _
    // Predicated region
    $region6: #{protonet_spct_forward.1} parent=1 // pred_check
      _
    $region7: #{protonet_spct_forward.1} parent=1 // pred_check_branch
      %24 = sbr.rel (0) target = $region9
    $region8: #{protonet_spct_forward.1} parent=1 // pred_region
      _
    $region9: #{protonet_spct_forward.1} parent=1 // pred_fallthru
      _
    // Predicated region
    $region10: #{protonet_spct_forward.1} parent=1 // pred_check
      _
    $region11: #{protonet_spct_forward.1} parent=1 // pred_check_branch
      %26 = sbr.rel (0) target = $region13
    $region12: #{protonet_spct_forward.1} parent=1 // pred_region
      _
    $region13: #{protonet_spct_forward.1} parent=1 // pred_fallthru
      _
    // Predicated region
    $region14: #{protonet_spct_forward.1} parent=1 // pred_check
      _
    $region15: #{protonet_spct_forward.1} parent=1 // pred_check_branch
      %28 = sbr.rel (0) target = $region17
    $region16: #{protonet_spct_forward.1} parent=1 // pred_region
      _
    $region17: #{protonet_spct_forward.1} parent=1 // pred_fallthru
      _
    // Predicated region
    $region18: #{protonet_spct_forward.1} parent=1 // pred_check
      _
    $region19: #{protonet_spct_forward.1} parent=1 // pred_check_branch
      %30 = sbr.rel (0) target = $region21
    $region20: #{protonet_spct_forward.1} parent=1 // pred_region
      _
    $region21: #{protonet_spct_forward.1} parent=1 // pred_fallthru
      _
    // Predicated region
    $region22: #{protonet_spct_forward.1} parent=1 // pred_check
      _
    $region23: #{protonet_spct_forward.1} parent=1 // pred_check_branch
      %32 = sbr.rel (0) target = $region25
    $region24: #{protonet_spct_forward.1} parent=1 // pred_region
      _
    $region25: #{protonet_spct_forward.1} parent=1 // pred_fallthru
      _
    // Predicated region
    $region26: #{protonet_spct_forward.1} parent=1 // pred_check
      _
    $region27: #{protonet_spct_forward.1} parent=1 // pred_check_branch
      %34 = sbr.rel (0) target = $region29
    $region28: #{protonet_spct_forward.1} parent=1 // pred_region
      _
    $region29: #{protonet_spct_forward.1} parent=1 // pred_fallthru
      _
    // Predicated region
    $region30: #{protonet_spct_forward.1} parent=1 // pred_check
      _
    $region31: #{protonet_spct_forward.1} parent=1 // pred_check_branch
      %36 = sbr.rel (0) target = $region33
    $region32: #{protonet_spct_forward.1} parent=1 // pred_region
      _
    $region33: #{protonet_spct_forward.1} parent=1 // pred_fallthru
      _
    // Predicated region
    $region34: #{protonet_spct_forward.1} parent=1 // pred_check
      _
    $region35: #{protonet_spct_forward.1} parent=1 // pred_check_branch
      %38 = sbr.rel (0) target = $region37
    $region36: #{protonet_spct_forward.1} parent=1 // pred_region
      _
    $region37: #{protonet_spct_forward.1} parent=1 // pred_fallthru
      _
    // Predicated region
    $region38: #{protonet_spct_forward.1} parent=1 // pred_check
      _
    $region39: #{protonet_spct_forward.1} parent=1 // pred_check_branch
      %40 = sbr.rel (0) target = $region41
    $region40: #{protonet_spct_forward.1} parent=1 // pred_region
      _
    $region41: #{protonet_spct_forward.1} parent=1 // pred_fallthru
      _
    // Predicated region
    $region42: #{protonet_spct_forward.1} parent=1 // pred_check
      _
    $region43: #{protonet_spct_forward.1} parent=1 // pred_check_branch
      %42 = sbr.rel (0) target = $region45
    $region44: #{protonet_spct_forward.1} parent=1 // pred_region
      _
    $region45: #{protonet_spct_forward.1} parent=1 // pred_fallthru
      _
    // Predicated region
    $region46: #{protonet_spct_forward.1} parent=1 // pred_check
      _
    $region47: #{protonet_spct_forward.1} parent=1 // pred_check_branch
      %44 = sbr.rel (0) target = $region49
    $region48: #{protonet_spct_forward.1} parent=1 // pred_region
      _
    $region49: #{protonet_spct_forward.1} parent=1 // pred_fallthru
      _
    // Predicated region
    $region50: #{protonet_spct_forward.1} parent=1 // pred_check
      _
    $region51: #{protonet_spct_forward.1} parent=1 // pred_check_branch
      %46 = sbr.rel (0) target = $region53
    $region52: #{protonet_spct_forward.1} parent=1 // pred_region
      _
    $region53: #{protonet_spct_forward.1} parent=1 // pred_fallthru
      _
    %v48 = vld [vmem:[%s0] sm:$0xf]
    %v49 = vld [vmem:[%s0 + $0x4] sm:$0xf]
    %v50 = vld [vmem:[%s0 + $0x8] sm:$0xf]
    %v51 = vld [vmem:[%s0 + $0xc] sm:$0xf]
    %v52 = vld [vmem:[%s0 + $0x10] sm:$0xf]
    %v53 = vld [vmem:[%s0 + $0x14] sm:$0xf]
    %v54 = vld [vmem:[%s0 + $0x18] sm:$0xf]
    %v55 = vld [vmem:[%s0 + $0x1c] sm:$0xf]
    %v56 = vld [vmem:[%s0 + $0x20] sm:$0xf]
    %v57 = vld [vmem:[%s0 + $0x24] sm:$0xf]
    %v58 = vld [vmem:[%s0 + $0x28] sm:$0xf]
    %v59 = vld [vmem:[%s0 + $0x2c] sm:$0xf]
    %v60 = vld [vmem:[%s0 + $0x30] sm:$0xf]
    %v61 = vld [vmem:[%s0 + $0x34] sm:$0xf]
    %v62 = vld [vmem:[%s0 + $0x38] sm:$0xf]
    %v63 = vld [vmem:[%s0 + $0x3c] sm:$0xf]
    %v64 = vld [vmem:[%s0 + $0x40] sm:$0xf]
    %v65 = vld [vmem:[%s0 + $0x44] sm:$0xf]
    %v66 = vld [vmem:[%s0 + $0x48] sm:$0xf]
    %v67 = vld [vmem:[%s0 + $0x4c] sm:$0xf]
    %v68 = vld [vmem:[%s0 + $0x50] sm:$0xf]
    %v69 = vld [vmem:[%s0 + $0x54] sm:$0xf]
    %v70 = vld [vmem:[%s0 + $0x58] sm:$0xf]
    %v71 = vld [vmem:[%s0 + $0x5c] sm:$0xf]
    %v72 = vld [vmem:[%s0 + $0x60] sm:$0xf]
    %v73 = vld [vmem:[%s0 + $0x64] sm:$0xf]
    %v74 = vld [vmem:[%s0 + $0x68] sm:$0xf]
    %v75 = vld [vmem:[%s0 + $0x6c] sm:$0xf]
    %v76 = vld [vmem:[%s0 + $0x70] sm:$0xf]
    %v77 = vld [vmem:[%s0 + $0x74] sm:$0xf]
    %v78 = vld [vmem:[%s0 + $0x78] sm:$0xf]
    %v79 = vld [vmem:[%s0 + $0x7c] sm:$0xf]
    %v80 = vld [vmem:[%s0 + $0x80] sm:$0xf]
    %v81 = vld [vmem:[%s0 + $0x84] sm:$0xf]
    %v82 = vld [vmem:[%s0 + $0x88] sm:$0xf]
    %v83 = vld [vmem:[%s0 + $0x8c] sm:$0xf]
    %v84 = vld [vmem:[%s0 + $0x90] sm:$0xf]
    %v85 = vld [vmem:[%s0 + $0x94] sm:$0xf]
    %v86 = vld [vmem:[%s0 + $0x98] sm:$0xf]
    %v87 = vld [vmem:[%s0 + $0x9c] sm:$0xf]
    %v88 = vld [vmem:[%s0 + $0xa0] sm:$0xf]
    %v89 = vld [vmem:[%s0 + $0xa4] sm:$0xf]
    %v90 = vld [vmem:[%s0 + $0xa8] sm:$0xf]
    %v91 = vld [vmem:[%s0 + $0xac] sm:$0xf]
    %v92 = vld [vmem:[%s0 + $0xb0] sm:$0xf]
    %v93 = vld [vmem:[%s0 + $0xb4] sm:$0xf]
    %v94 = vld [vmem:[%s0 + $0xb8] sm:$0xf]
    %v95 = vld [vmem:[%s0 + $0xbc] sm:$0xf]
    %v96 = vld [vmem:[%s0 + $0xc0] sm:$0xf]
    %v97 = vld [vmem:[%s0 + $0xc4] sm:$0xf]
    %v98 = vld [vmem:[%s0 + $0xc8] sm:$0xf]
    %v99 = vld [vmem:[%s0 + $0xcc] sm:$0xf]
    %v100 = vld [vmem:[%s0 + $0xd0] sm:$0xf]
    %v101 = vld [vmem:[%s0 + $0xd4] sm:$0xf]
    %v102 = vld [vmem:[%s0 + $0xd8] sm:$0xf]
    %v103 = vld [vmem:[%s0 + $0xdc] sm:$0xf]
    %v104 = vld [vmem:[%s0 + $0xe0] sm:$0xf]
    %v105 = vld [vmem:[%s0 + $0xe4] sm:$0xf]
    %v106 = vld [vmem:[%s0 + $0xe8] sm:$0xf]
    %v107 = vld [vmem:[%s0 + $0xec] sm:$0xf]
    %v108 = vld [vmem:[%s0 + $0xf0] sm:$0xf]
    %v109 = vld [vmem:[%s0 + $0xf4] sm:$0xf]
    %v110 = vld [vmem:[%s0 + $0xf8] sm:$0xf]
    %v111 = vld [vmem:[%s0 + $0xfc] sm:$0xf]
    %v112 = vld [vmem:[%s3] sm:$0xf]
    %v113 = vld [vmem:[%s3 + $0x4] sm:$0xf]
    %v178 = vunpack.c.l.b16 %v48
    %v179 = vunpack.c.l.b16 %v49
    %v180 = vunpack.c.l.b16 %v50
    %v181 = vunpack.c.l.b16 %v51
    %v182 = vunpack.c.l.b16 %v52
    %v183 = vunpack.c.l.b16 %v53
    %v184 = vunpack.c.l.b16 %v54
    %v185 = vunpack.c.l.b16 %v55
    %v186 = vunpack.c.l.b16 %v56
    %v187 = vunpack.c.l.b16 %v57
    %v188 = vunpack.c.l.b16 %v58
    %v189 = vunpack.c.l.b16 %v59
    %v190 = vunpack.c.l.b16 %v60
    %v191 = vunpack.c.l.b16 %v61
    %v192 = vunpack.c.l.b16 %v62
    %v193 = vunpack.c.l.b16 %v63
    %v194 = vunpack.c.l.b16 %v64
    %v195 = vunpack.c.l.b16 %v65
    %v196 = vunpack.c.l.b16 %v66
    %v197 = vunpack.c.l.b16 %v67
    %v198 = vunpack.c.l.b16 %v68
    %v199 = vunpack.c.l.b16 %v69
    %v200 = vunpack.c.l.b16 %v70
    %v201 = vunpack.c.l.b16 %v71
    %v202 = vunpack.c.l.b16 %v72
    %v203 = vunpack.c.l.b16 %v73
    %v204 = vunpack.c.l.b16 %v74
    %v205 = vunpack.c.l.b16 %v75
    %v206 = vunpack.c.l.b16 %v76
    %v207 = vunpack.c.l.b16 %v77
    %v208 = vunpack.c.l.b16 %v78
    %v209 = vunpack.c.l.b16 %v79
    %v210 = vunpack.c.l.b16 %v80
    %v211 = vunpack.c.l.b16 %v81
    %v212 = vunpack.c.l.b16 %v82
    %v213 = vunpack.c.l.b16 %v83
    %v214 = vunpack.c.l.b16 %v84
    %v215 = vunpack.c.l.b16 %v85
    %v216 = vunpack.c.l.b16 %v86
    %v217 = vunpack.c.l.b16 %v87
    %v218 = vunpack.c.l.b16 %v88
    %v219 = vunpack.c.l.b16 %v89
    %v220 = vunpack.c.l.b16 %v90
    %v221 = vunpack.c.l.b16 %v91
    %v222 = vunpack.c.l.b16 %v92
    %v223 = vunpack.c.l.b16 %v93
    %v224 = vunpack.c.l.b16 %v94
    %v225 = vunpack.c.l.b16 %v95
    %v226 = vunpack.c.l.b16 %v96
    %v227 = vunpack.c.l.b16 %v97
    %v228 = vunpack.c.l.b16 %v98
    %v229 = vunpack.c.l.b16 %v99
    %v230 = vunpack.c.l.b16 %v100
    %v231 = vunpack.c.l.b16 %v101
    %v232 = vunpack.c.l.b16 %v102
    %v233 = vunpack.c.l.b16 %v103
    %v234 = vunpack.c.l.b16 %v104
    %v235 = vunpack.c.l.b16 %v105
    %v236 = vunpack.c.l.b16 %v106
    %v237 = vunpack.c.l.b16 %v107
    %v238 = vunpack.c.l.b16 %v108
    %v239 = vunpack.c.l.b16 %v109
    %v240 = vunpack.c.l.b16 %v110
    %v241 = vunpack.c.l.b16 %v111
    %v242 = vpack.c.b16 %v179, %v178
    %v243 = vpack.c.b16 %v181, %v180
    %v244 = vpack.c.b16 %v183, %v182
    %v245 = vpack.c.b16 %v185, %v184
    %v246 = vpack.c.b16 %v187, %v186
    %v247 = vpack.c.b16 %v189, %v188
    %v248 = vpack.c.b16 %v191, %v190
    %v249 = vpack.c.b16 %v193, %v192
    %v250 = vpack.c.b16 %v195, %v194
    %v251 = vpack.c.b16 %v197, %v196
    %v252 = vpack.c.b16 %v199, %v198
    %v253 = vpack.c.b16 %v201, %v200
    %v254 = vpack.c.b16 %v203, %v202
    %v255 = vpack.c.b16 %v205, %v204
    %v256 = vpack.c.b16 %v207, %v206
    %v257 = vpack.c.b16 %v209, %v208
    %v258 = vpack.c.b16 %v211, %v210
    %v259 = vpack.c.b16 %v213, %v212
    %v260 = vpack.c.b16 %v215, %v214
    %v261 = vpack.c.b16 %v217, %v216
    %v262 = vpack.c.b16 %v219, %v218
    %v263 = vpack.c.b16 %v221, %v220
    %v264 = vpack.c.b16 %v223, %v222
    %v265 = vpack.c.b16 %v225, %v224
    %v266 = vpack.c.b16 %v227, %v226
    %v267 = vpack.c.b16 %v229, %v228
    %v268 = vpack.c.b16 %v231, %v230
    %v269 = vpack.c.b16 %v233, %v232
    %v270 = vpack.c.b16 %v235, %v234
    %v271 = vpack.c.b16 %v237, %v236
    %v272 = vpack.c.b16 %v239, %v238
    %v273 = vpack.c.b16 %v241, %v240
    %v276 = vunpack.c.l.b16 %v112
    %v277 = vunpack.c.l.b16 %v113
    %v278 = vpack.c.b16 %v277, %v276
    %vm280 = vcmask 130048
    %v282 = vsel %vm280, %v242, 0
    %v285 = vsel %vm280, %v243, 0
    %v288 = vsel %vm280, %v244, 0
    %v291 = vsel %vm280, %v245, 0
    %v294 = vsel %vm280, %v246, 0
    %v297 = vsel %vm280, %v247, 0
    %v300 = vsel %vm280, %v248, 0
    %v303 = vsel %vm280, %v249, 0
    %v306 = vsel %vm280, %v250, 0
    %v309 = vsel %vm280, %v251, 0
    %v312 = vsel %vm280, %v252, 0
    %v315 = vsel %vm280, %v253, 0
    %v318 = vsel %vm280, %v254, 0
    %v321 = vsel %vm280, %v255, 0
    %v324 = vsel %vm280, %v256, 0
    %v327 = vsel %vm280, %v257, 0
    %v330 = vsel %vm280, %v258, 0
    %v333 = vsel %vm280, %v259, 0
    %v336 = vsel %vm280, %v260, 0
    %v339 = vsel %vm280, %v261, 0
    %v342 = vsel %vm280, %v262, 0
    %v345 = vsel %vm280, %v263, 0
    %v348 = vsel %vm280, %v264, 0
    %v351 = vsel %vm280, %v265, 0
    %v354 = vsel %vm280, %v266, 0
    %v357 = vsel %vm280, %v267, 0
    %v360 = vsel %vm280, %v268, 0
    %v363 = vsel %vm280, %v269, 0
    %v366 = vsel %vm280, %v270, 0
    %v369 = vsel %vm280, %v271, 0
    %v372 = vsel %vm280, %v272, 0
    %v375 = vsel %vm280, %v273, 0
    %377 = vmatpush.bf16.msra.mxu0 0
    %378 = vmatpush.bf16.msra.mxu0 0
    %379 = vmatpush.bf16.msra.mxu0 0
    %380 = vmatpush.bf16.msra.mxu0 0
    %381 = vmatpush.bf16.msra.mxu0 0
    %382 = vmatpush.bf16.msra.mxu0 0
    %383 = vmatpush.bf16.msra.mxu0 0
    %384 = vmatpush.bf16.msra.mxu0 %v278
    %385 = vmatmul.bf16.gmra.mxu0 %v282
    %v386 = vpop.f32.mrf.mxu0
    %v387 = vadd.f32 0.0, %v386
    %v388 = vpop.f32.mrf.mxu0
    %v389 = vadd.f32 0.0, %v388
    %390 = vmatmul.bf16.gmra.mxu0 %v285
    %v391 = vpop.f32.mrf.mxu0
    %v392 = vadd.f32 0.0, %v391
    %v393 = vpop.f32.mrf.mxu0
    %v394 = vadd.f32 0.0, %v393
    %395 = vmatmul.bf16.gmra.mxu0 %v288
    %v396 = vpop.f32.mrf.mxu0
    %v397 = vadd.f32 0.0, %v396
    %v398 = vpop.f32.mrf.mxu0
    %v399 = vadd.f32 0.0, %v398
    %400 = vmatmul.bf16.gmra.mxu0 %v291
    %v401 = vpop.f32.mrf.mxu0
    %v402 = vadd.f32 0.0, %v401
    %v403 = vpop.f32.mrf.mxu0
    %v404 = vadd.f32 0.0, %v403
    %405 = vmatmul.bf16.gmra.mxu0 %v294
    %v406 = vpop.f32.mrf.mxu0
    %v407 = vadd.f32 0.0, %v406
    %v408 = vpop.f32.mrf.mxu0
    %v409 = vadd.f32 0.0, %v408
    %410 = vmatmul.bf16.gmra.mxu0 %v297
    %v411 = vpop.f32.mrf.mxu0
    %v412 = vadd.f32 0.0, %v411
    %v413 = vpop.f32.mrf.mxu0
    %v414 = vadd.f32 0.0, %v413
    %415 = vmatmul.bf16.gmra.mxu0 %v300
    %v416 = vpop.f32.mrf.mxu0
    %v417 = vadd.f32 0.0, %v416
    %v418 = vpop.f32.mrf.mxu0
    %v419 = vadd.f32 0.0, %v418
    %420 = vmatmul.bf16.gmra.mxu0 %v303
    %v421 = vpop.f32.mrf.mxu0
    %v422 = vadd.f32 0.0, %v421
    %v423 = vpop.f32.mrf.mxu0
    %v424 = vadd.f32 0.0, %v423
    %425 = vmatmul.bf16.gmra.mxu0 %v306
    %v426 = vpop.f32.mrf.mxu0
    %v427 = vadd.f32 0.0, %v426
    %v428 = vpop.f32.mrf.mxu0
    %v429 = vadd.f32 0.0, %v428
    %430 = vmatmul.bf16.gmra.mxu0 %v309
    %v431 = vpop.f32.mrf.mxu0
    %v432 = vadd.f32 0.0, %v431
    %v433 = vpop.f32.mrf.mxu0
    %v434 = vadd.f32 0.0, %v433
    %435 = vmatmul.bf16.gmra.mxu0 %v312
    %v436 = vpop.f32.mrf.mxu0
    %v437 = vadd.f32 0.0, %v436
    %v438 = vpop.f32.mrf.mxu0
    %v439 = vadd.f32 0.0, %v438
    %440 = vmatmul.bf16.gmra.mxu0 %v315
    %v441 = vpop.f32.mrf.mxu0
    %v442 = vadd.f32 0.0, %v441
    %v443 = vpop.f32.mrf.mxu0
    %v444 = vadd.f32 0.0, %v443
    %445 = vmatmul.bf16.gmra.mxu0 %v318
    %v446 = vpop.f32.mrf.mxu0
    %v447 = vadd.f32 0.0, %v446
    %v448 = vpop.f32.mrf.mxu0
    %v449 = vadd.f32 0.0, %v448
    %450 = vmatmul.bf16.gmra.mxu0 %v321
    %v451 = vpop.f32.mrf.mxu0
    %v452 = vadd.f32 0.0, %v451
    %v453 = vpop.f32.mrf.mxu0
    %v454 = vadd.f32 0.0, %v453
    %455 = vmatmul.bf16.gmra.mxu0 %v324
    %v456 = vpop.f32.mrf.mxu0
    %v457 = vadd.f32 0.0, %v456
    %v458 = vpop.f32.mrf.mxu0
    %v459 = vadd.f32 0.0, %v458
    %460 = vmatmul.bf16.gmra.mxu0 %v327
    %v461 = vpop.f32.mrf.mxu0
    %v462 = vadd.f32 0.0, %v461
    %v463 = vpop.f32.mrf.mxu0
    %v464 = vadd.f32 0.0, %v463
    %465 = vmatmul.bf16.gmra.mxu0 %v330
    %v466 = vpop.f32.mrf.mxu0
    %v467 = vadd.f32 0.0, %v466
    %v468 = vpop.f32.mrf.mxu0
    %v469 = vadd.f32 0.0, %v468
    %470 = vmatmul.bf16.gmra.mxu0 %v333
    %v471 = vpop.f32.mrf.mxu0
    %v472 = vadd.f32 0.0, %v471
    %v473 = vpop.f32.mrf.mxu0
    %v474 = vadd.f32 0.0, %v473
    %475 = vmatmul.bf16.gmra.mxu0 %v336
    %v476 = vpop.f32.mrf.mxu0
    %v477 = vadd.f32 0.0, %v476
    %v478 = vpop.f32.mrf.mxu0
    %v479 = vadd.f32 0.0, %v478
    %480 = vmatmul.bf16.gmra.mxu0 %v339
    %v481 = vpop.f32.mrf.mxu0
    %v482 = vadd.f32 0.0, %v481
    %v483 = vpop.f32.mrf.mxu0
    %v484 = vadd.f32 0.0, %v483
    %485 = vmatmul.bf16.gmra.mxu0 %v342
    %v486 = vpop.f32.mrf.mxu0
    %v487 = vadd.f32 0.0, %v486
    %v488 = vpop.f32.mrf.mxu0
    %v489 = vadd.f32 0.0, %v488
    %490 = vmatmul.bf16.gmra.mxu0 %v345
    %v491 = vpop.f32.mrf.mxu0
    %v492 = vadd.f32 0.0, %v491
    %v493 = vpop.f32.mrf.mxu0
    %v494 = vadd.f32 0.0, %v493
    %495 = vmatmul.bf16.gmra.mxu0 %v348
    %v496 = vpop.f32.mrf.mxu0
    %v497 = vadd.f32 0.0, %v496
    %v498 = vpop.f32.mrf.mxu0
    %v499 = vadd.f32 0.0, %v498
    %500 = vmatmul.bf16.gmra.mxu0 %v351
    %v501 = vpop.f32.mrf.mxu0
    %v502 = vadd.f32 0.0, %v501
    %v503 = vpop.f32.mrf.mxu0
    %v504 = vadd.f32 0.0, %v503
    %505 = vmatmul.bf16.gmra.mxu0 %v354
    %v506 = vpop.f32.mrf.mxu0
    %v507 = vadd.f32 0.0, %v506
    %v508 = vpop.f32.mrf.mxu0
    %v509 = vadd.f32 0.0, %v508
    %510 = vmatmul.bf16.gmra.mxu0 %v357
    %v511 = vpop.f32.mrf.mxu0
    %v512 = vadd.f32 0.0, %v511
    %v513 = vpop.f32.mrf.mxu0
    %v514 = vadd.f32 0.0, %v513
    %515 = vmatmul.bf16.gmra.mxu0 %v360
    %v516 = vpop.f32.mrf.mxu0
    %v517 = vadd.f32 0.0, %v516
    %v518 = vpop.f32.mrf.mxu0
    %v519 = vadd.f32 0.0, %v518
    %520 = vmatmul.bf16.gmra.mxu0 %v363
    %v521 = vpop.f32.mrf.mxu0
    %v522 = vadd.f32 0.0, %v521
    %v523 = vpop.f32.mrf.mxu0
    %v524 = vadd.f32 0.0, %v523
    %525 = vmatmul.bf16.gmra.mxu0 %v366
    %v526 = vpop.f32.mrf.mxu0
    %v527 = vadd.f32 0.0, %v526
    %v528 = vpop.f32.mrf.mxu0
    %v529 = vadd.f32 0.0, %v528
    %530 = vmatmul.bf16.gmra.mxu0 %v369
    %v531 = vpop.f32.mrf.mxu0
    %v532 = vadd.f32 0.0, %v531
    %v533 = vpop.f32.mrf.mxu0
    %v534 = vadd.f32 0.0, %v533
    %535 = vmatmul.bf16.gmra.mxu0 %v372
    %v536 = vpop.f32.mrf.mxu0
    %v537 = vadd.f32 0.0, %v536
    %v538 = vpop.f32.mrf.mxu0
    %v539 = vadd.f32 0.0, %v538
    %540 = vmatmul.bf16.gmra.mxu0 %v375
    %v541 = vpop.f32.mrf.mxu0
    %v542 = vadd.f32 0.0, %v541
    %v543 = vpop.f32.mrf.mxu0
    %v544 = vadd.f32 0.0, %v543
    %545 = vdwg.mxu0
    %v546 = vmax.f32 %v387, 0.0
    %v547 = vmax.f32 %v389, 0.0
    %v548 = vmax.f32 %v392, 0.0
    %v549 = vmax.f32 %v394, 0.0
    %v550 = vmax.f32 %v397, 0.0
    %v551 = vmax.f32 %v399, 0.0
    %v552 = vmax.f32 %v402, 0.0
    %v553 = vmax.f32 %v404, 0.0
    %v554 = vmax.f32 %v407, 0.0
    %v555 = vmax.f32 %v409, 0.0
    %v556 = vmax.f32 %v412, 0.0
    %v557 = vmax.f32 %v414, 0.0
    %v558 = vmax.f32 %v417, 0.0
    %v559 = vmax.f32 %v419, 0.0
    %v560 = vmax.f32 %v422, 0.0
    %v561 = vmax.f32 %v424, 0.0
    %v562 = vmax.f32 %v427, 0.0
    %v563 = vmax.f32 %v429, 0.0
    %v564 = vmax.f32 %v432, 0.0
    %v565 = vmax.f32 %v434, 0.0
    %v566 = vmax.f32 %v437, 0.0
    %v567 = vmax.f32 %v439, 0.0
    %v568 = vmax.f32 %v442, 0.0
    %v569 = vmax.f32 %v444, 0.0
    %v570 = vmax.f32 %v447, 0.0
    %v571 = vmax.f32 %v449, 0.0
    %v572 = vmax.f32 %v452, 0.0
    %v573 = vmax.f32 %v454, 0.0
    %v574 = vmax.f32 %v457, 0.0
    %v575 = vmax.f32 %v459, 0.0
    %v576 = vmax.f32 %v462, 0.0
    %v577 = vmax.f32 %v464, 0.0
    %v578 = vmax.f32 %v467, 0.0
    %v579 = vmax.f32 %v469, 0.0
    %v580 = vmax.f32 %v472, 0.0
    %v581 = vmax.f32 %v474, 0.0
    %v582 = vmax.f32 %v477, 0.0
    %v583 = vmax.f32 %v479, 0.0
    %v584 = vmax.f32 %v482, 0.0
    %v585 = vmax.f32 %v484, 0.0
    %v586 = vmax.f32 %v487, 0.0
    %v587 = vmax.f32 %v489, 0.0
    %v588 = vmax.f32 %v492, 0.0
    %v589 = vmax.f32 %v494, 0.0
    %v590 = vmax.f32 %v497, 0.0
    %v591 = vmax.f32 %v499, 0.0
    %v592 = vmax.f32 %v502, 0.0
    %v593 = vmax.f32 %v504, 0.0
    %v594 = vmax.f32 %v507, 0.0
    %v595 = vmax.f32 %v509, 0.0
    %v596 = vmax.f32 %v512, 0.0
    %v597 = vmax.f32 %v514, 0.0
    %v598 = vmax.f32 %v517, 0.0
    %v599 = vmax.f32 %v519, 0.0
    %v600 = vmax.f32 %v522, 0.0
    %v601 = vmax.f32 %v524, 0.0
    %v602 = vmax.f32 %v527, 0.0
    %v603 = vmax.f32 %v529, 0.0
    %v604 = vmax.f32 %v532, 0.0
    %v605 = vmax.f32 %v534, 0.0
    %v606 = vmax.f32 %v537, 0.0
    %v607 = vmax.f32 %v539, 0.0
    %v608 = vmax.f32 %v542, 0.0
    %v609 = vmax.f32 %v544, 0.0
    %v610 = vpack.c.bf16 %v547, %v546
    %v611 = vpack.c.bf16 %v549, %v548
    %v612 = vpack.c.bf16 %v551, %v550
    %v613 = vpack.c.bf16 %v553, %v552
    %v614 = vpack.c.bf16 %v555, %v554
    %v615 = vpack.c.bf16 %v557, %v556
    %v616 = vpack.c.bf16 %v559, %v558
    %v617 = vpack.c.bf16 %v561, %v560
    %v618 = vpack.c.bf16 %v563, %v562
    %v619 = vpack.c.bf16 %v565, %v564
    %v620 = vpack.c.bf16 %v567, %v566
    %v621 = vpack.c.bf16 %v569, %v568
    %v622 = vpack.c.bf16 %v571, %v570
    %v623 = vpack.c.bf16 %v573, %v572
    %v624 = vpack.c.bf16 %v575, %v574
    %v625 = vpack.c.bf16 %v577, %v576
    %v626 = vpack.c.bf16 %v579, %v578
    %v627 = vpack.c.bf16 %v581, %v580
    %v628 = vpack.c.bf16 %v583, %v582
    %v629 = vpack.c.bf16 %v585, %v584
    %v630 = vpack.c.bf16 %v587, %v586
    %v631 = vpack.c.bf16 %v589, %v588
    %v632 = vpack.c.bf16 %v591, %v590
    %v633 = vpack.c.bf16 %v593, %v592
    %v634 = vpack.c.bf16 %v595, %v594
    %v635 = vpack.c.bf16 %v597, %v596
    %v636 = vpack.c.bf16 %v599, %v598
    %v637 = vpack.c.bf16 %v601, %v600
    %v638 = vpack.c.bf16 %v603, %v602
    %v639 = vpack.c.bf16 %v605, %v604
    %v640 = vpack.c.bf16 %v607, %v606
    %v641 = vpack.c.bf16 %v609, %v608
    %v642 = vld [vmem:[%s4] sm:$0xf]
    %v643 = vld [vmem:[%s4 + $0x4] sm:$0xf]
    %v644 = vld [vmem:[%s4 + $0x8] sm:$0xf]
    %v645 = vld [vmem:[%s4 + $0xc] sm:$0xf]
    %v646 = vld [vmem:[%s4 + $0x10] sm:$0xf]
    %v647 = vld [vmem:[%s4 + $0x14] sm:$0xf]
    %v648 = vld [vmem:[%s4 + $0x18] sm:$0xf]
    %v649 = vld [vmem:[%s4 + $0x1c] sm:$0xf]
    %v650 = vld [vmem:[%s5] sm:$0x1]
    %v652 = vperm.slane %v650, 0
    %v662 = vunpack.c.l.b16 %v642
    %v663 = vunpack.c.l.b16 %v643
    %v664 = vunpack.c.l.b16 %v644
    %v665 = vunpack.c.l.b16 %v645
    %v666 = vunpack.c.l.b16 %v646
    %v667 = vunpack.c.l.b16 %v647
    %v668 = vunpack.c.l.b16 %v648
    %v669 = vunpack.c.l.b16 %v649
    %v670 = vpack.c.b16 %v663, %v662
    %v671 = vpack.c.b16 %v665, %v664
    %v672 = vpack.c.b16 %v667, %v666
    %v673 = vpack.c.b16 %v669, %v668
    %vm678 = vcmask 523264
    %v680 = vsel %vm678, %v610, 0
    %v683 = vsel %vm678, %v611, 0
    %v686 = vsel %vm678, %v612, 0
    %v689 = vsel %vm678, %v613, 0
    %v692 = vsel %vm678, %v614, 0
    %v695 = vsel %vm678, %v615, 0
    %v698 = vsel %vm678, %v616, 0
    %v701 = vsel %vm678, %v617, 0
    %v704 = vsel %vm678, %v618, 0
    %v707 = vsel %vm678, %v619, 0
    %v710 = vsel %vm678, %v620, 0
    %v713 = vsel %vm678, %v621, 0
    %v716 = vsel %vm678, %v622, 0
    %v719 = vsel %vm678, %v623, 0
    %v722 = vsel %vm678, %v624, 0
    %v725 = vsel %vm678, %v625, 0
    %v728 = vsel %vm678, %v626, 0
    %v731 = vsel %vm678, %v627, 0
    %v734 = vsel %vm678, %v628, 0
    %v737 = vsel %vm678, %v629, 0
    %v740 = vsel %vm678, %v630, 0
    %v743 = vsel %vm678, %v631, 0
    %v746 = vsel %vm678, %v632, 0
    %v749 = vsel %vm678, %v633, 0
    %v752 = vsel %vm678, %v634, 0
    %v755 = vsel %vm678, %v635, 0
    %v758 = vsel %vm678, %v636, 0
    %v761 = vsel %vm678, %v637, 0
    %v764 = vsel %vm678, %v638, 0
    %v767 = vsel %vm678, %v639, 0
    %v770 = vsel %vm678, %v640, 0
    %v773 = vsel %vm678, %v641, 0
    %775 = vmatpush.bf16.msra.mxu0 0
    %776 = vmatpush.bf16.msra.mxu0 0
    %777 = vmatpush.bf16.msra.mxu0 0
    %778 = vmatpush.bf16.msra.mxu0 0
    %779 = vmatpush.bf16.msra.mxu0 %v673
    %780 = vmatpush.bf16.msra.mxu0 %v672
    %781 = vmatpush.bf16.msra.mxu0 %v671
    %782 = vmatpush.bf16.msra.mxu0 %v670
    %783 = vmatmul.bf16.gmra.mxu0 %v680
    %v784 = vpop.f32.mrf.mxu0
    %v785 = vadd.f32 %v652, %v784
    %v786 = vpop.f32.mrf.mxu0
    %v787 = vadd.f32 %v652, %v786
    %788 = vmatmul.bf16.gmra.mxu0 %v683
    %v789 = vpop.f32.mrf.mxu0
    %v790 = vadd.f32 %v652, %v789
    %v791 = vpop.f32.mrf.mxu0
    %v792 = vadd.f32 %v652, %v791
    %793 = vmatmul.bf16.gmra.mxu0 %v686
    %v794 = vpop.f32.mrf.mxu0
    %v795 = vadd.f32 %v652, %v794
    %v796 = vpop.f32.mrf.mxu0
    %v797 = vadd.f32 %v652, %v796
    %798 = vmatmul.bf16.gmra.mxu0 %v689
    %v799 = vpop.f32.mrf.mxu0
    %v800 = vadd.f32 %v652, %v799
    %v801 = vpop.f32.mrf.mxu0
    %v802 = vadd.f32 %v652, %v801
    %803 = vmatmul.bf16.gmra.mxu0 %v692
    %v804 = vpop.f32.mrf.mxu0
    %v805 = vadd.f32 %v652, %v804
    %v806 = vpop.f32.mrf.mxu0
    %v807 = vadd.f32 %v652, %v806
    %808 = vmatmul.bf16.gmra.mxu0 %v695
    %v809 = vpop.f32.mrf.mxu0
    %v810 = vadd.f32 %v652, %v809
    %v811 = vpop.f32.mrf.mxu0
    %v812 = vadd.f32 %v652, %v811
    %813 = vmatmul.bf16.gmra.mxu0 %v698
    %v814 = vpop.f32.mrf.mxu0
    %v815 = vadd.f32 %v652, %v814
    %v816 = vpop.f32.mrf.mxu0
    %v817 = vadd.f32 %v652, %v816
    %818 = vmatmul.bf16.gmra.mxu0 %v701
    %v819 = vpop.f32.mrf.mxu0
    %v820 = vadd.f32 %v652, %v819
    %v821 = vpop.f32.mrf.mxu0
    %v822 = vadd.f32 %v652, %v821
    %823 = vmatmul.bf16.gmra.mxu0 %v704
    %v824 = vpop.f32.mrf.mxu0
    %v825 = vadd.f32 %v652, %v824
    %v826 = vpop.f32.mrf.mxu0
    %v827 = vadd.f32 %v652, %v826
    %828 = vmatmul.bf16.gmra.mxu0 %v707
    %v829 = vpop.f32.mrf.mxu0
    %v830 = vadd.f32 %v652, %v829
    %v831 = vpop.f32.mrf.mxu0
    %v832 = vadd.f32 %v652, %v831
    %833 = vmatmul.bf16.gmra.mxu0 %v710
    %v834 = vpop.f32.mrf.mxu0
    %v835 = vadd.f32 %v652, %v834
    %v836 = vpop.f32.mrf.mxu0
    %v837 = vadd.f32 %v652, %v836
    %838 = vmatmul.bf16.gmra.mxu0 %v713
    %v839 = vpop.f32.mrf.mxu0
    %v840 = vadd.f32 %v652, %v839
    %v841 = vpop.f32.mrf.mxu0
    %v842 = vadd.f32 %v652, %v841
    %843 = vmatmul.bf16.gmra.mxu0 %v716
    %v844 = vpop.f32.mrf.mxu0
    %v845 = vadd.f32 %v652, %v844
    %v846 = vpop.f32.mrf.mxu0
    %v847 = vadd.f32 %v652, %v846
    %848 = vmatmul.bf16.gmra.mxu0 %v719
    %v849 = vpop.f32.mrf.mxu0
    %v850 = vadd.f32 %v652, %v849
    %v851 = vpop.f32.mrf.mxu0
    %v852 = vadd.f32 %v652, %v851
    %853 = vmatmul.bf16.gmra.mxu0 %v722
    %v854 = vpop.f32.mrf.mxu0
    %v855 = vadd.f32 %v652, %v854
    %v856 = vpop.f32.mrf.mxu0
    %v857 = vadd.f32 %v652, %v856
    %858 = vmatmul.bf16.gmra.mxu0 %v725
    %v859 = vpop.f32.mrf.mxu0
    %v860 = vadd.f32 %v652, %v859
    %v861 = vpop.f32.mrf.mxu0
    %v862 = vadd.f32 %v652, %v861
    %863 = vmatmul.bf16.gmra.mxu0 %v728
    %v864 = vpop.f32.mrf.mxu0
    %v865 = vadd.f32 %v652, %v864
    %v866 = vpop.f32.mrf.mxu0
    %v867 = vadd.f32 %v652, %v866
    %868 = vmatmul.bf16.gmra.mxu0 %v731
    %v869 = vpop.f32.mrf.mxu0
    %v870 = vadd.f32 %v652, %v869
    %v871 = vpop.f32.mrf.mxu0
    %v872 = vadd.f32 %v652, %v871
    %873 = vmatmul.bf16.gmra.mxu0 %v734
    %v874 = vpop.f32.mrf.mxu0
    %v875 = vadd.f32 %v652, %v874
    %v876 = vpop.f32.mrf.mxu0
    %v877 = vadd.f32 %v652, %v876
    %878 = vmatmul.bf16.gmra.mxu0 %v737
    %v879 = vpop.f32.mrf.mxu0
    %v880 = vadd.f32 %v652, %v879
    %v881 = vpop.f32.mrf.mxu0
    %v882 = vadd.f32 %v652, %v881
    %883 = vmatmul.bf16.gmra.mxu0 %v740
    %v884 = vpop.f32.mrf.mxu0
    %v885 = vadd.f32 %v652, %v884
    %v886 = vpop.f32.mrf.mxu0
    %v887 = vadd.f32 %v652, %v886
    %888 = vmatmul.bf16.gmra.mxu0 %v743
    %v889 = vpop.f32.mrf.mxu0
    %v890 = vadd.f32 %v652, %v889
    %v891 = vpop.f32.mrf.mxu0
    %v892 = vadd.f32 %v652, %v891
    %893 = vmatmul.bf16.gmra.mxu0 %v746
    %v894 = vpop.f32.mrf.mxu0
    %v895 = vadd.f32 %v652, %v894
    %v896 = vpop.f32.mrf.mxu0
    %v897 = vadd.f32 %v652, %v896
    %898 = vmatmul.bf16.gmra.mxu0 %v749
    %v899 = vpop.f32.mrf.mxu0
    %v900 = vadd.f32 %v652, %v899
    %v901 = vpop.f32.mrf.mxu0
    %v902 = vadd.f32 %v652, %v901
    %903 = vmatmul.bf16.gmra.mxu0 %v752
    %v904 = vpop.f32.mrf.mxu0
    %v905 = vadd.f32 %v652, %v904
    %v906 = vpop.f32.mrf.mxu0
    %v907 = vadd.f32 %v652, %v906
    %908 = vmatmul.bf16.gmra.mxu0 %v755
    %v909 = vpop.f32.mrf.mxu0
    %v910 = vadd.f32 %v652, %v909
    %v911 = vpop.f32.mrf.mxu0
    %v912 = vadd.f32 %v652, %v911
    %913 = vmatmul.bf16.gmra.mxu0 %v758
    %v914 = vpop.f32.mrf.mxu0
    %v915 = vadd.f32 %v652, %v914
    %v916 = vpop.f32.mrf.mxu0
    %v917 = vadd.f32 %v652, %v916
    %918 = vmatmul.bf16.gmra.mxu0 %v761
    %v919 = vpop.f32.mrf.mxu0
    %v920 = vadd.f32 %v652, %v919
    %v921 = vpop.f32.mrf.mxu0
    %v922 = vadd.f32 %v652, %v921
    %923 = vmatmul.bf16.gmra.mxu0 %v764
    %v924 = vpop.f32.mrf.mxu0
    %v925 = vadd.f32 %v652, %v924
    %v926 = vpop.f32.mrf.mxu0
    %v927 = vadd.f32 %v652, %v926
    %928 = vmatmul.bf16.gmra.mxu0 %v767
    %v929 = vpop.f32.mrf.mxu0
    %v930 = vadd.f32 %v652, %v929
    %v931 = vpop.f32.mrf.mxu0
    %v932 = vadd.f32 %v652, %v931
    %933 = vmatmul.bf16.gmra.mxu0 %v770
    %v934 = vpop.f32.mrf.mxu0
    %v935 = vadd.f32 %v652, %v934
    %v936 = vpop.f32.mrf.mxu0
    %v937 = vadd.f32 %v652, %v936
    %938 = vmatmul.bf16.gmra.mxu0 %v773
    %v939 = vpop.f32.mrf.mxu0
    %v940 = vadd.f32 %v652, %v939
    %v941 = vpop.f32.mrf.mxu0
    %v942 = vadd.f32 %v652, %v941
    %943 = vdwg.mxu0
    %v944 = vmax.f32 %v785, 0.0
    %v945 = vmax.f32 %v787, 0.0
    %v946 = vmax.f32 %v790, 0.0
    %v947 = vmax.f32 %v792, 0.0
    %v948 = vmax.f32 %v795, 0.0
    %v949 = vmax.f32 %v797, 0.0
    %v950 = vmax.f32 %v800, 0.0
    %v951 = vmax.f32 %v802, 0.0
    %v952 = vmax.f32 %v805, 0.0
    %v953 = vmax.f32 %v807, 0.0
    %v954 = vmax.f32 %v810, 0.0
    %v955 = vmax.f32 %v812, 0.0
    %v956 = vmax.f32 %v815, 0.0
    %v957 = vmax.f32 %v817, 0.0
    %v958 = vmax.f32 %v820, 0.0
    %v959 = vmax.f32 %v822, 0.0
    %v960 = vmax.f32 %v825, 0.0
    %v961 = vmax.f32 %v827, 0.0
    %v962 = vmax.f32 %v830, 0.0
    %v963 = vmax.f32 %v832, 0.0
    %v964 = vmax.f32 %v835, 0.0
    %v965 = vmax.f32 %v837, 0.0
    %v966 = vmax.f32 %v840, 0.0
    %v967 = vmax.f32 %v842, 0.0
    %v968 = vmax.f32 %v845, 0.0
    %v969 = vmax.f32 %v847, 0.0
    %v970 = vmax.f32 %v850, 0.0
    %v971 = vmax.f32 %v852, 0.0
    %v972 = vmax.f32 %v855, 0.0
    %v973 = vmax.f32 %v857, 0.0
    %v974 = vmax.f32 %v860, 0.0
    %v975 = vmax.f32 %v862, 0.0
    %v976 = vmax.f32 %v865, 0.0
    %v977 = vmax.f32 %v867, 0.0
    %v978 = vmax.f32 %v870, 0.0
    %v979 = vmax.f32 %v872, 0.0
    %v980 = vmax.f32 %v875, 0.0
    %v981 = vmax.f32 %v877, 0.0
    %v982 = vmax.f32 %v880, 0.0
    %v983 = vmax.f32 %v882, 0.0
    %v984 = vmax.f32 %v885, 0.0
    %v985 = vmax.f32 %v887, 0.0
    %v986 = vmax.f32 %v890, 0.0
    %v987 = vmax.f32 %v892, 0.0
    %v988 = vmax.f32 %v895, 0.0
    %v989 = vmax.f32 %v897, 0.0
    %v990 = vmax.f32 %v900, 0.0
    %v991 = vmax.f32 %v902, 0.0
    %v992 = vmax.f32 %v905, 0.0
    %v993 = vmax.f32 %v907, 0.0
    %v994 = vmax.f32 %v910, 0.0
    %v995 = vmax.f32 %v912, 0.0
    %v996 = vmax.f32 %v915, 0.0
    %v997 = vmax.f32 %v917, 0.0
    %v998 = vmax.f32 %v920, 0.0
    %v999 = vmax.f32 %v922, 0.0
    %v1000 = vmax.f32 %v925, 0.0
    %v1001 = vmax.f32 %v927, 0.0
    %v1002 = vmax.f32 %v930, 0.0
    %v1003 = vmax.f32 %v932, 0.0
    %v1004 = vmax.f32 %v935, 0.0
    %v1005 = vmax.f32 %v937, 0.0
    %v1006 = vmax.f32 %v940, 0.0
    %v1007 = vmax.f32 %v942, 0.0
    %v1008 = vpack.c.bf16 %v945, %v944
    %v1009 = vpack.c.bf16 %v947, %v946
    %v1010 = vpack.c.bf16 %v949, %v948
    %v1011 = vpack.c.bf16 %v951, %v950
    %v1012 = vpack.c.bf16 %v953, %v952
    %v1013 = vpack.c.bf16 %v955, %v954
    %v1014 = vpack.c.bf16 %v957, %v956
    %v1015 = vpack.c.bf16 %v959, %v958
    %v1016 = vpack.c.bf16 %v961, %v960
    %v1017 = vpack.c.bf16 %v963, %v962
    %v1018 = vpack.c.bf16 %v965, %v964
    %v1019 = vpack.c.bf16 %v967, %v966
    %v1020 = vpack.c.bf16 %v969, %v968
    %v1021 = vpack.c.bf16 %v971, %v970
    %v1022 = vpack.c.bf16 %v973, %v972
    %v1023 = vpack.c.bf16 %v975, %v974
    %v1024 = vpack.c.bf16 %v977, %v976
    %v1025 = vpack.c.bf16 %v979, %v978
    %v1026 = vpack.c.bf16 %v981, %v980
    %v1027 = vpack.c.bf16 %v983, %v982
    %v1028 = vpack.c.bf16 %v985, %v984
    %v1029 = vpack.c.bf16 %v987, %v986
    %v1030 = vpack.c.bf16 %v989, %v988
    %v1031 = vpack.c.bf16 %v991, %v990
    %v1032 = vpack.c.bf16 %v993, %v992
    %v1033 = vpack.c.bf16 %v995, %v994
    %v1034 = vpack.c.bf16 %v997, %v996
    %v1035 = vpack.c.bf16 %v999, %v998
    %v1036 = vpack.c.bf16 %v1001, %v1000
    %v1037 = vpack.c.bf16 %v1003, %v1002
    %v1038 = vpack.c.bf16 %v1005, %v1004
    %v1039 = vpack.c.bf16 %v1007, %v1006
    %v1040 = vld [vmem:[%s6] sm:$0xf]
    %v1041 = vld [vmem:[%s6 + $0x4] sm:$0xf]
    %v1042 = vld [vmem:[%s6 + $0x8] sm:$0xf]
    %v1043 = vld [vmem:[%s6 + $0xc] sm:$0xf]
    %v1044 = vld [vmem:[%s6 + $0x10] sm:$0xf]
    %v1045 = vld [vmem:[%s6 + $0x14] sm:$0xf]
    %v1046 = vld [vmem:[%s6 + $0x18] sm:$0xf]
    %v1047 = vld [vmem:[%s6 + $0x1c] sm:$0xf]
    %v1048 = vld [vmem:[%s6 + $0x20] sm:$0xf]
    %v1049 = vld [vmem:[%s6 + $0x24] sm:$0xf]
    %v1050 = vld [vmem:[%s6 + $0x28] sm:$0xf]
    %v1051 = vld [vmem:[%s6 + $0x2c] sm:$0xf]
    %v1052 = vld [vmem:[%s6 + $0x30] sm:$0xf]
    %v1053 = vld [vmem:[%s6 + $0x34] sm:$0xf]
    %v1054 = vld [vmem:[%s6 + $0x38] sm:$0xf]
    %v1055 = vld [vmem:[%s6 + $0x3c] sm:$0xf]
    %v1056 = vld [vmem:[%s7] sm:$0x1]
    %v1058 = vperm.slane %v1056, 0
    %v1076 = vunpack.c.l.b16 %v1040
    %v1077 = vunpack.c.l.b16 %v1041
    %v1078 = vunpack.c.l.b16 %v1042
    %v1079 = vunpack.c.l.b16 %v1043
    %v1080 = vunpack.c.l.b16 %v1044
    %v1081 = vunpack.c.l.b16 %v1045
    %v1082 = vunpack.c.l.b16 %v1046
    %v1083 = vunpack.c.l.b16 %v1047
    %v1084 = vunpack.c.l.b16 %v1048
    %v1085 = vunpack.c.l.b16 %v1049
    %v1086 = vunpack.c.l.b16 %v1050
    %v1087 = vunpack.c.l.b16 %v1051
    %v1088 = vunpack.c.l.b16 %v1052
    %v1089 = vunpack.c.l.b16 %v1053
    %v1090 = vunpack.c.l.b16 %v1054
    %v1091 = vunpack.c.l.b16 %v1055
    %v1092 = vpack.c.b16 %v1077, %v1076
    %v1093 = vpack.c.b16 %v1079, %v1078
    %v1094 = vpack.c.b16 %v1081, %v1080
    %v1095 = vpack.c.b16 %v1083, %v1082
    %v1096 = vpack.c.b16 %v1085, %v1084
    %v1097 = vpack.c.b16 %v1087, %v1086
    %v1098 = vpack.c.b16 %v1089, %v1088
    %v1099 = vpack.c.b16 %v1091, %v1090
    %1108 = vmatpush.bf16.msra.mxu0 %v1099
    %1109 = vmatpush.bf16.msra.mxu0 %v1098
    %1110 = vmatpush.bf16.msra.mxu0 %v1097
    %1111 = vmatpush.bf16.msra.mxu0 %v1096
    %1112 = vmatpush.bf16.msra.mxu0 %v1095
    %1113 = vmatpush.bf16.msra.mxu0 %v1094
    %1114 = vmatpush.bf16.msra.mxu0 %v1093
    %1115 = vmatpush.bf16.msra.mxu0 %v1092
    %1116 = vmatmul.bf16.gmra.mxu0 %v1008
    %v1117 = vpop.f32.mrf.mxu0
    %v1118 = vadd.f32 %v1058, %v1117
    %v1119 = vpop.f32.mrf.mxu0
    %v1120 = vadd.f32 %v1058, %v1119
    %1121 = vmatmul.bf16.gmra.mxu0 %v1009
    %v1122 = vpop.f32.mrf.mxu0
    %v1123 = vadd.f32 %v1058, %v1122
    %v1124 = vpop.f32.mrf.mxu0
    %v1125 = vadd.f32 %v1058, %v1124
    %1126 = vmatmul.bf16.gmra.mxu0 %v1010
    %v1127 = vpop.f32.mrf.mxu0
    %v1128 = vadd.f32 %v1058, %v1127
    %v1129 = vpop.f32.mrf.mxu0
    %v1130 = vadd.f32 %v1058, %v1129
    %1131 = vmatmul.bf16.gmra.mxu0 %v1011
    %v1132 = vpop.f32.mrf.mxu0
    %v1133 = vadd.f32 %v1058, %v1132
    %v1134 = vpop.f32.mrf.mxu0
    %v1135 = vadd.f32 %v1058, %v1134
    %1136 = vmatmul.bf16.gmra.mxu0 %v1012
    %v1137 = vpop.f32.mrf.mxu0
    %v1138 = vadd.f32 %v1058, %v1137
    %v1139 = vpop.f32.mrf.mxu0
    %v1140 = vadd.f32 %v1058, %v1139
    %1141 = vmatmul.bf16.gmra.mxu0 %v1013
    %v1142 = vpop.f32.mrf.mxu0
    %v1143 = vadd.f32 %v1058, %v1142
    %v1144 = vpop.f32.mrf.mxu0
    %v1145 = vadd.f32 %v1058, %v1144
    %1146 = vmatmul.bf16.gmra.mxu0 %v1014
    %v1147 = vpop.f32.mrf.mxu0
    %v1148 = vadd.f32 %v1058, %v1147
    %v1149 = vpop.f32.mrf.mxu0
    %v1150 = vadd.f32 %v1058, %v1149
    %1151 = vmatmul.bf16.gmra.mxu0 %v1015
    %v1152 = vpop.f32.mrf.mxu0
    %v1153 = vadd.f32 %v1058, %v1152
    %v1154 = vpop.f32.mrf.mxu0
    %v1155 = vadd.f32 %v1058, %v1154
    %1156 = vmatmul.bf16.gmra.mxu0 %v1016
    %v1157 = vpop.f32.mrf.mxu0
    %v1158 = vadd.f32 %v1058, %v1157
    %v1159 = vpop.f32.mrf.mxu0
    %v1160 = vadd.f32 %v1058, %v1159
    %1161 = vmatmul.bf16.gmra.mxu0 %v1017
    %v1162 = vpop.f32.mrf.mxu0
    %v1163 = vadd.f32 %v1058, %v1162
    %v1164 = vpop.f32.mrf.mxu0
    %v1165 = vadd.f32 %v1058, %v1164
    %1166 = vmatmul.bf16.gmra.mxu0 %v1018
    %v1167 = vpop.f32.mrf.mxu0
    %v1168 = vadd.f32 %v1058, %v1167
    %v1169 = vpop.f32.mrf.mxu0
    %v1170 = vadd.f32 %v1058, %v1169
    %1171 = vmatmul.bf16.gmra.mxu0 %v1019
    %v1172 = vpop.f32.mrf.mxu0
    %v1173 = vadd.f32 %v1058, %v1172
    %v1174 = vpop.f32.mrf.mxu0
    %v1175 = vadd.f32 %v1058, %v1174
    %1176 = vmatmul.bf16.gmra.mxu0 %v1020
    %v1177 = vpop.f32.mrf.mxu0
    %v1178 = vadd.f32 %v1058, %v1177
    %v1179 = vpop.f32.mrf.mxu0
    %v1180 = vadd.f32 %v1058, %v1179
    %1181 = vmatmul.bf16.gmra.mxu0 %v1021
    %v1182 = vpop.f32.mrf.mxu0
    %v1183 = vadd.f32 %v1058, %v1182
    %v1184 = vpop.f32.mrf.mxu0
    %v1185 = vadd.f32 %v1058, %v1184
    %1186 = vmatmul.bf16.gmra.mxu0 %v1022
    %v1187 = vpop.f32.mrf.mxu0
    %v1188 = vadd.f32 %v1058, %v1187
    %v1189 = vpop.f32.mrf.mxu0
    %v1190 = vadd.f32 %v1058, %v1189
    %1191 = vmatmul.bf16.gmra.mxu0 %v1023
    %v1192 = vpop.f32.mrf.mxu0
    %v1193 = vadd.f32 %v1058, %v1192
    %v1194 = vpop.f32.mrf.mxu0
    %v1195 = vadd.f32 %v1058, %v1194
    %1196 = vmatmul.bf16.gmra.mxu0 %v1024
    %v1197 = vpop.f32.mrf.mxu0
    %v1198 = vadd.f32 %v1058, %v1197
    %v1199 = vpop.f32.mrf.mxu0
    %v1200 = vadd.f32 %v1058, %v1199
    %1201 = vmatmul.bf16.gmra.mxu0 %v1025
    %v1202 = vpop.f32.mrf.mxu0
    %v1203 = vadd.f32 %v1058, %v1202
    %v1204 = vpop.f32.mrf.mxu0
    %v1205 = vadd.f32 %v1058, %v1204
    %1206 = vmatmul.bf16.gmra.mxu0 %v1026
    %v1207 = vpop.f32.mrf.mxu0
    %v1208 = vadd.f32 %v1058, %v1207
    %v1209 = vpop.f32.mrf.mxu0
    %v1210 = vadd.f32 %v1058, %v1209
    %1211 = vmatmul.bf16.gmra.mxu0 %v1027
    %v1212 = vpop.f32.mrf.mxu0
    %v1213 = vadd.f32 %v1058, %v1212
    %v1214 = vpop.f32.mrf.mxu0
    %v1215 = vadd.f32 %v1058, %v1214
    %1216 = vmatmul.bf16.gmra.mxu0 %v1028
    %v1217 = vpop.f32.mrf.mxu0
    %v1218 = vadd.f32 %v1058, %v1217
    %v1219 = vpop.f32.mrf.mxu0
    %v1220 = vadd.f32 %v1058, %v1219
    %1221 = vmatmul.bf16.gmra.mxu0 %v1029
    %v1222 = vpop.f32.mrf.mxu0
    %v1223 = vadd.f32 %v1058, %v1222
    %v1224 = vpop.f32.mrf.mxu0
    %v1225 = vadd.f32 %v1058, %v1224
    %1226 = vmatmul.bf16.gmra.mxu0 %v1030
    %v1227 = vpop.f32.mrf.mxu0
    %v1228 = vadd.f32 %v1058, %v1227
    %v1229 = vpop.f32.mrf.mxu0
    %v1230 = vadd.f32 %v1058, %v1229
    %1231 = vmatmul.bf16.gmra.mxu0 %v1031
    %v1232 = vpop.f32.mrf.mxu0
    %v1233 = vadd.f32 %v1058, %v1232
    %v1234 = vpop.f32.mrf.mxu0
    %v1235 = vadd.f32 %v1058, %v1234
    %1236 = vmatmul.bf16.gmra.mxu0 %v1032
    %v1237 = vpop.f32.mrf.mxu0
    %v1238 = vadd.f32 %v1058, %v1237
    %v1239 = vpop.f32.mrf.mxu0
    %v1240 = vadd.f32 %v1058, %v1239
    %1241 = vmatmul.bf16.gmra.mxu0 %v1033
    %v1242 = vpop.f32.mrf.mxu0
    %v1243 = vadd.f32 %v1058, %v1242
    %v1244 = vpop.f32.mrf.mxu0
    %v1245 = vadd.f32 %v1058, %v1244
    %1246 = vmatmul.bf16.gmra.mxu0 %v1034
    %v1247 = vpop.f32.mrf.mxu0
    %v1248 = vadd.f32 %v1058, %v1247
    %v1249 = vpop.f32.mrf.mxu0
    %v1250 = vadd.f32 %v1058, %v1249
    %1251 = vmatmul.bf16.gmra.mxu0 %v1035
    %v1252 = vpop.f32.mrf.mxu0
    %v1253 = vadd.f32 %v1058, %v1252
    %v1254 = vpop.f32.mrf.mxu0
    %v1255 = vadd.f32 %v1058, %v1254
    %1256 = vmatmul.bf16.gmra.mxu0 %v1036
    %v1257 = vpop.f32.mrf.mxu0
    %v1258 = vadd.f32 %v1058, %v1257
    %v1259 = vpop.f32.mrf.mxu0
    %v1260 = vadd.f32 %v1058, %v1259
    %1261 = vmatmul.bf16.gmra.mxu0 %v1037
    %v1262 = vpop.f32.mrf.mxu0
    %v1263 = vadd.f32 %v1058, %v1262
    %v1264 = vpop.f32.mrf.mxu0
    %v1265 = vadd.f32 %v1058, %v1264
    %1266 = vmatmul.bf16.gmra.mxu0 %v1038
    %v1267 = vpop.f32.mrf.mxu0
    %v1268 = vadd.f32 %v1058, %v1267
    %v1269 = vpop.f32.mrf.mxu0
    %v1270 = vadd.f32 %v1058, %v1269
    %1271 = vmatmul.bf16.gmra.mxu0 %v1039
    %v1272 = vpop.f32.mrf.mxu0
    %v1273 = vadd.f32 %v1058, %v1272
    %v1274 = vpop.f32.mrf.mxu0
    %v1275 = vadd.f32 %v1058, %v1274
    %1276 = vdwg.mxu0
    %v1277 = vmax.f32 %v1118, 0.0
    %v1278 = vmax.f32 %v1120, 0.0
    %v1279 = vmax.f32 %v1123, 0.0
    %v1280 = vmax.f32 %v1125, 0.0
    %v1281 = vmax.f32 %v1128, 0.0
    %v1282 = vmax.f32 %v1130, 0.0
    %v1283 = vmax.f32 %v1133, 0.0
    %v1284 = vmax.f32 %v1135, 0.0
    %v1285 = vmax.f32 %v1138, 0.0
    %v1286 = vmax.f32 %v1140, 0.0
    %v1287 = vmax.f32 %v1143, 0.0
    %v1288 = vmax.f32 %v1145, 0.0
    %v1289 = vmax.f32 %v1148, 0.0
    %v1290 = vmax.f32 %v1150, 0.0
    %v1291 = vmax.f32 %v1153, 0.0
    %v1292 = vmax.f32 %v1155, 0.0
    %v1293 = vmax.f32 %v1158, 0.0
    %v1294 = vmax.f32 %v1160, 0.0
    %v1295 = vmax.f32 %v1163, 0.0
    %v1296 = vmax.f32 %v1165, 0.0
    %v1297 = vmax.f32 %v1168, 0.0
    %v1298 = vmax.f32 %v1170, 0.0
    %v1299 = vmax.f32 %v1173, 0.0
    %v1300 = vmax.f32 %v1175, 0.0
    %v1301 = vmax.f32 %v1178, 0.0
    %v1302 = vmax.f32 %v1180, 0.0
    %v1303 = vmax.f32 %v1183, 0.0
    %v1304 = vmax.f32 %v1185, 0.0
    %v1305 = vmax.f32 %v1188, 0.0
    %v1306 = vmax.f32 %v1190, 0.0
    %v1307 = vmax.f32 %v1193, 0.0
    %v1308 = vmax.f32 %v1195, 0.0
    %v1309 = vmax.f32 %v1198, 0.0
    %v1310 = vmax.f32 %v1200, 0.0
    %v1311 = vmax.f32 %v1203, 0.0
    %v1312 = vmax.f32 %v1205, 0.0
    %v1313 = vmax.f32 %v1208, 0.0
    %v1314 = vmax.f32 %v1210, 0.0
    %v1315 = vmax.f32 %v1213, 0.0
    %v1316 = vmax.f32 %v1215, 0.0
    %v1317 = vmax.f32 %v1218, 0.0
    %v1318 = vmax.f32 %v1220, 0.0
    %v1319 = vmax.f32 %v1223, 0.0
    %v1320 = vmax.f32 %v1225, 0.0
    %v1321 = vmax.f32 %v1228, 0.0
    %v1322 = vmax.f32 %v1230, 0.0
    %v1323 = vmax.f32 %v1233, 0.0
    %v1324 = vmax.f32 %v1235, 0.0
    %v1325 = vmax.f32 %v1238, 0.0
    %v1326 = vmax.f32 %v1240, 0.0
    %v1327 = vmax.f32 %v1243, 0.0
    %v1328 = vmax.f32 %v1245, 0.0
    %v1329 = vmax.f32 %v1248, 0.0
    %v1330 = vmax.f32 %v1250, 0.0
    %v1331 = vmax.f32 %v1253, 0.0
    %v1332 = vmax.f32 %v1255, 0.0
    %v1333 = vmax.f32 %v1258, 0.0
    %v1334 = vmax.f32 %v1260, 0.0
    %v1335 = vmax.f32 %v1263, 0.0
    %v1336 = vmax.f32 %v1265, 0.0
    %v1337 = vmax.f32 %v1268, 0.0
    %v1338 = vmax.f32 %v1270, 0.0
    %v1339 = vmax.f32 %v1273, 0.0
    %v1340 = vmax.f32 %v1275, 0.0
    %v1341 = vld [vmem:[%s2] sm:$0xff]
    %v1342 = vld [vmem:[%s2 + $0x8] sm:$0xff]
    %v1343 = vld [vmem:[%s2 + $0x10] sm:$0xff]
    %v1344 = vld [vmem:[%s2 + $0x18] sm:$0xff]
    %1345 = vmatpush.msra.mxu0 %v561
    %1346 = vmatpush.msra.mxu0 %v560
    %1347 = vmatpush.msra.mxu0 %v559
    %1348 = vmatpush.msra.mxu0 %v558
    %1349 = vmatpush.msra.mxu0 %v557
    %1350 = vmatpush.msra.mxu0 %v556
    %1351 = vmatpush.msra.mxu0 %v555
    %1352 = vmatpush.msra.mxu0 %v554
    %1353 = vmatpush.msra.mxu0 %v553
    %1354 = vmatpush.msra.mxu0 %v552
    %1355 = vmatpush.msra.mxu0 %v551
    %1356 = vmatpush.msra.mxu0 %v550
    %1357 = vmatpush.msra.mxu0 %v549
    %1358 = vmatpush.msra.mxu0 %v548
    %1359 = vmatpush.msra.mxu0 %v547
    %1360 = vmatpush.msra.mxu0 %v546
    %1361 = vmatmul.f32.gmra.mxu0 %v1341
    %v1362 = vpop.f32.mrf.mxu0
    %v1363 = vadd.f32 0.0, %v1362
    %1364 = vdwg.mxu0
    %1365 = vmatpush.msra.mxu0 %v577
    %1366 = vmatpush.msra.mxu0 %v576
    %1367 = vmatpush.msra.mxu0 %v575
    %1368 = vmatpush.msra.mxu0 %v574
    %1369 = vmatpush.msra.mxu0 %v573
    %1370 = vmatpush.msra.mxu0 %v572
    %1371 = vmatpush.msra.mxu0 %v571
    %1372 = vmatpush.msra.mxu0 %v570
    %1373 = vmatpush.msra.mxu0 %v569
    %1374 = vmatpush.msra.mxu0 %v568
    %1375 = vmatpush.msra.mxu0 %v567
    %1376 = vmatpush.msra.mxu0 %v566
    %1377 = vmatpush.msra.mxu0 %v565
    %1378 = vmatpush.msra.mxu0 %v564
    %1379 = vmatpush.msra.mxu0 %v563
    %1380 = vmatpush.msra.mxu0 %v562
    %1381 = vmatmul.f32.gmra.mxu0 %v1342
    %v1382 = vpop.f32.mrf.mxu0
    %v1383 = vadd.f32 %v1363, %v1382
    %1384 = vdwg.mxu0
    %1385 = vmatpush.msra.mxu0 %v593
    %1386 = vmatpush.msra.mxu0 %v592
    %1387 = vmatpush.msra.mxu0 %v591
    %1388 = vmatpush.msra.mxu0 %v590
    %1389 = vmatpush.msra.mxu0 %v589
    %1390 = vmatpush.msra.mxu0 %v588
    %1391 = vmatpush.msra.mxu0 %v587
    %1392 = vmatpush.msra.mxu0 %v586
    %1393 = vmatpush.msra.mxu0 %v585
    %1394 = vmatpush.msra.mxu0 %v584
    %1395 = vmatpush.msra.mxu0 %v583
    %1396 = vmatpush.msra.mxu0 %v582
    %1397 = vmatpush.msra.mxu0 %v581
    %1398 = vmatpush.msra.mxu0 %v580
    %1399 = vmatpush.msra.mxu0 %v579
    %1400 = vmatpush.msra.mxu0 %v578
    %1401 = vmatmul.f32.gmra.mxu0 %v1343
    %v1402 = vpop.f32.mrf.mxu0
    %v1403 = vadd.f32 %v1383, %v1402
    %1404 = vdwg.mxu0
    %1405 = vmatpush.msra.mxu0 %v609
    %1406 = vmatpush.msra.mxu0 %v608
    %1407 = vmatpush.msra.mxu0 %v607
    %1408 = vmatpush.msra.mxu0 %v606
    %1409 = vmatpush.msra.mxu0 %v605
    %1410 = vmatpush.msra.mxu0 %v604
    %1411 = vmatpush.msra.mxu0 %v603
    %1412 = vmatpush.msra.mxu0 %v602
    %1413 = vmatpush.msra.mxu0 %v601
    %1414 = vmatpush.msra.mxu0 %v600
    %1415 = vmatpush.msra.mxu0 %v599
    %1416 = vmatpush.msra.mxu0 %v598
    %1417 = vmatpush.msra.mxu0 %v597
    %1418 = vmatpush.msra.mxu0 %v596
    %1419 = vmatpush.msra.mxu0 %v595
    %1420 = vmatpush.msra.mxu0 %v594
    %1421 = vmatmul.f32.gmra.mxu0 %v1344
    %v1422 = vpop.f32.mrf.mxu0
    %v1423 = vadd.f32 %v1403, %v1422
    %1424 = vdwg.mxu0
    %1425 = vmatpush.msra.mxu0 %v1292
    %1426 = vmatpush.msra.mxu0 %v1291
    %1427 = vmatpush.msra.mxu0 %v1290
    %1428 = vmatpush.msra.mxu0 %v1289
    %1429 = vmatpush.msra.mxu0 %v1288
    %1430 = vmatpush.msra.mxu0 %v1287
    %1431 = vmatpush.msra.mxu0 %v1286
    %1432 = vmatpush.msra.mxu0 %v1285
    %1433 = vmatpush.msra.mxu0 %v1284
    %1434 = vmatpush.msra.mxu0 %v1283
    %1435 = vmatpush.msra.mxu0 %v1282
    %1436 = vmatpush.msra.mxu0 %v1281
    %1437 = vmatpush.msra.mxu0 %v1280
    %1438 = vmatpush.msra.mxu0 %v1279
    %1439 = vmatpush.msra.mxu0 %v1278
    %1440 = vmatpush.msra.mxu0 %v1277
    %1441 = vmatmul.f32.gmra.mxu0 %v1341
    %v1442 = vpop.f32.mrf.mxu0
    %v1443 = vadd.f32 0.0, %v1442
    %1444 = vdwg.mxu0
    %1445 = vmatpush.msra.mxu0 %v1308
    %1446 = vmatpush.msra.mxu0 %v1307
    %1447 = vmatpush.msra.mxu0 %v1306
    %1448 = vmatpush.msra.mxu0 %v1305
    %1449 = vmatpush.msra.mxu0 %v1304
    %1450 = vmatpush.msra.mxu0 %v1303
    %1451 = vmatpush.msra.mxu0 %v1302
    %1452 = vmatpush.msra.mxu0 %v1301
    %1453 = vmatpush.msra.mxu0 %v1300
    %1454 = vmatpush.msra.mxu0 %v1299
    %1455 = vmatpush.msra.mxu0 %v1298
    %1456 = vmatpush.msra.mxu0 %v1297
    %1457 = vmatpush.msra.mxu0 %v1296
    %1458 = vmatpush.msra.mxu0 %v1295
    %1459 = vmatpush.msra.mxu0 %v1294
    %1460 = vmatpush.msra.mxu0 %v1293
    %1461 = vmatmul.f32.gmra.mxu0 %v1342
    %v1462 = vpop.f32.mrf.mxu0
    %v1463 = vadd.f32 %v1443, %v1462
    %1464 = vdwg.mxu0
    %1465 = vmatpush.msra.mxu0 %v1324
    %1466 = vmatpush.msra.mxu0 %v1323
    %1467 = vmatpush.msra.mxu0 %v1322
    %1468 = vmatpush.msra.mxu0 %v1321
    %1469 = vmatpush.msra.mxu0 %v1320
    %1470 = vmatpush.msra.mxu0 %v1319
    %1471 = vmatpush.msra.mxu0 %v1318
    %1472 = vmatpush.msra.mxu0 %v1317
    %1473 = vmatpush.msra.mxu0 %v1316
    %1474 = vmatpush.msra.mxu0 %v1315
    %1475 = vmatpush.msra.mxu0 %v1314
    %1476 = vmatpush.msra.mxu0 %v1313
    %1477 = vmatpush.msra.mxu0 %v1312
    %1478 = vmatpush.msra.mxu0 %v1311
    %1479 = vmatpush.msra.mxu0 %v1310
    %1480 = vmatpush.msra.mxu0 %v1309
    %1481 = vmatmul.f32.gmra.mxu0 %v1343
    %v1482 = vpop.f32.mrf.mxu0
    %v1483 = vadd.f32 %v1463, %v1482
    %1484 = vdwg.mxu0
    %1485 = vmatpush.msra.mxu0 %v1340
    %1486 = vmatpush.msra.mxu0 %v1339
    %1487 = vmatpush.msra.mxu0 %v1338
    %1488 = vmatpush.msra.mxu0 %v1337
    %1489 = vmatpush.msra.mxu0 %v1336
    %1490 = vmatpush.msra.mxu0 %v1335
    %1491 = vmatpush.msra.mxu0 %v1334
    %1492 = vmatpush.msra.mxu0 %v1333
    %1493 = vmatpush.msra.mxu0 %v1332
    %1494 = vmatpush.msra.mxu0 %v1331
    %1495 = vmatpush.msra.mxu0 %v1330
    %1496 = vmatpush.msra.mxu0 %v1329
    %1497 = vmatpush.msra.mxu0 %v1328
    %1498 = vmatpush.msra.mxu0 %v1327
    %1499 = vmatpush.msra.mxu0 %v1326
    %1500 = vmatpush.msra.mxu0 %v1325
    %1501 = vmatmul.f32.gmra.mxu0 %v1344
    %v1502 = vpop.f32.mrf.mxu0
    %v1503 = vadd.f32 %v1483, %v1502
    %1504 = vdwg.mxu0
    %v1505 = vmul.f32 %v1423, %v1423
    %v1506 = vsel %vm678, %v1505, 0.0
    %1507 = vadd.xlane.f32.xlu0 %v1506
    %v1508 = vpop.xlane.xlu0 %1507
    %v1509 = vmul.f32 %v1503, %v1503
    %v1510 = vsel %vm678, %v1509, 0.0
    %1511 = vadd.xlane.f32.xlu0 %v1510
    %v1512 = vpop.xlane.xlu0 %1511
    %v1513 = vadd.f32 %v1508, %v1512
    %v1514 = vmax.f32 %v1513, 1e-16
    %v1515 = vrsqrt.pop %v1514
    %v1516 = vmul.f32 %v1515, %v1514
    %v1517 = vmul.f32 %v1516, %v1515
    %v1518 = vmul.f32 0.5, %v1517
    %v1519 = vsub.f32 1.5, %v1518
    %v1520 = vmul.f32 %v1515, %v1519
    %vm1521 = vweird.f32 %v1514
    %vm1522 = vweird.f32 %v1515
    %vm1523 = vmor %vm1521, %vm1522
    %v1524 = vsel %vm1523, %v1515, %v1520
    %v1525 = vmul.f32 %v1524, 10.0
    %v1526 = vmul.f32 %v1423, %v1525
    %v1527 = vmul.f32 %v1503, %v1525
    %v1528 = vld [vmem:[%s1] sm:$0xff]
    %v1529 = vld [vmem:[%s1 + $0x8] sm:$0xff]
    %v1530 = vld [vmem:[%s8] sm:$0xf]
    %v1531 = vld [vmem:[%s8 + $0x4] sm:$0xf]
    %v1532 = vld [vmem:[%s8 + $0x8] sm:$0xf]
    %v1533 = vld [vmem:[%s8 + $0xc] sm:$0xf]
    %v1534 = vld [vmem:[%s8 + $0x10] sm:$0xf]
    %v1535 = vld [vmem:[%s8 + $0x14] sm:$0xf]
    %v1536 = vld [vmem:[%s8 + $0x18] sm:$0xf]
    %v1537 = vld [vmem:[%s8 + $0x1c] sm:$0xf]
    %v1546 = vunpack.c.l.b16 %v1530
    %v1547 = vunpack.c.l.b16 %v1531
    %v1548 = vunpack.c.l.b16 %v1532
    %v1549 = vunpack.c.l.b16 %v1533
    %v1550 = vunpack.c.l.b16 %v1534
    %v1551 = vunpack.c.l.b16 %v1535
    %v1552 = vunpack.c.l.b16 %v1536
    %v1553 = vunpack.c.l.b16 %v1537
    %v1554 = vpack.c.b16 %v1547, %v1546
    %v1555 = vpack.c.b16 %v1549, %v1548
    %v1556 = vpack.c.b16 %v1551, %v1550
    %v1557 = vpack.c.b16 %v1553, %v1552
    %v1560 = vunpack.c.l.b16 %v1528
    %v1561 = vunpack.c.h.b16 %v1528
    %v1562 = vunpack.c.l.b16 %v1529
    %v1563 = vunpack.c.h.b16 %v1529
    %v1564 = vpack.c.b16 %v1562, %v1560
    %v1565 = vpack.c.b16 %v1563, %v1561
    %v1569 = vsel %vm280, %v1554, 0
    %v1572 = vsel %vm280, %v1555, 0
    %v1575 = vsel %vm280, %v1556, 0
    %v1578 = vsel %vm280, %v1557, 0
    %1580 = vmatpush.bf16.msra.mxu0 0
    %1581 = vmatpush.bf16.msra.mxu0 0
    %1582 = vmatpush.bf16.msra.mxu0 0
    %1583 = vmatpush.bf16.msra.mxu0 0
    %1584 = vmatpush.bf16.msra.mxu0 0
    %1585 = vmatpush.bf16.msra.mxu0 0
    %1586 = vmatpush.bf16.msra.mxu0 0
    %1587 = vmatpush.bf16.msra.mxu0 %v1564
    %1588 = vmatmul.bf16.gmra.mxu0 %v1569
    %v1589 = vpop.f32.mrf.mxu0
    %v1590 = vadd.f32 0.0, %v1589
    %v1591 = vpop.f32.mrf.mxu0
    %v1592 = vadd.f32 0.0, %v1591
    %1593 = vmatmul.bf16.gmra.mxu0 %v1572
    %v1594 = vpop.f32.mrf.mxu0
    %v1595 = vadd.f32 0.0, %v1594
    %v1596 = vpop.f32.mrf.mxu0
    %v1597 = vadd.f32 0.0, %v1596
    %1598 = vmatmul.bf16.gmra.mxu0 %v1575
    %v1599 = vpop.f32.mrf.mxu0
    %v1600 = vadd.f32 0.0, %v1599
    %v1601 = vpop.f32.mrf.mxu0
    %v1602 = vadd.f32 0.0, %v1601
    %1603 = vmatmul.bf16.gmra.mxu0 %v1578
    %v1604 = vpop.f32.mrf.mxu0
    %v1605 = vadd.f32 0.0, %v1604
    %v1606 = vpop.f32.mrf.mxu0
    %v1607 = vadd.f32 0.0, %v1606
    %1608 = vdwg.mxu0
    %1609 = vmatpush.bf16.msra.mxu0 0
    %1610 = vmatpush.bf16.msra.mxu0 0
    %1611 = vmatpush.bf16.msra.mxu0 0
    %1612 = vmatpush.bf16.msra.mxu0 0
    %1613 = vmatpush.bf16.msra.mxu0 0
    %1614 = vmatpush.bf16.msra.mxu0 0
    %1615 = vmatpush.bf16.msra.mxu0 0
    %1616 = vmatpush.bf16.msra.mxu0 %v1565
    %1617 = vmatmul.bf16.gmra.mxu0 %v1569
    %v1618 = vpop.f32.mrf.mxu0
    %v1619 = vadd.f32 0.0, %v1618
    %v1620 = vpop.f32.mrf.mxu0
    %v1621 = vadd.f32 0.0, %v1620
    %1622 = vmatmul.bf16.gmra.mxu0 %v1572
    %v1623 = vpop.f32.mrf.mxu0
    %v1624 = vadd.f32 0.0, %v1623
    %v1625 = vpop.f32.mrf.mxu0
    %v1626 = vadd.f32 0.0, %v1625
    %1627 = vmatmul.bf16.gmra.mxu0 %v1575
    %v1628 = vpop.f32.mrf.mxu0
    %v1629 = vadd.f32 0.0, %v1628
    %v1630 = vpop.f32.mrf.mxu0
    %v1631 = vadd.f32 0.0, %v1630
    %1632 = vmatmul.bf16.gmra.mxu0 %v1578
    %v1633 = vpop.f32.mrf.mxu0
    %v1634 = vadd.f32 0.0, %v1633
    %v1635 = vpop.f32.mrf.mxu0
    %v1636 = vadd.f32 0.0, %v1635
    %1637 = vdwg.mxu0
    %v1638 = vmax.f32 %v1590, 0.0
    %v1639 = vmax.f32 %v1619, 0.0
    %v1640 = vmax.f32 %v1592, 0.0
    %v1641 = vmax.f32 %v1621, 0.0
    %v1642 = vmax.f32 %v1595, 0.0
    %v1643 = vmax.f32 %v1624, 0.0
    %v1644 = vmax.f32 %v1597, 0.0
    %v1645 = vmax.f32 %v1626, 0.0
    %v1646 = vmax.f32 %v1600, 0.0
    %v1647 = vmax.f32 %v1629, 0.0
    %v1648 = vmax.f32 %v1602, 0.0
    %v1649 = vmax.f32 %v1631, 0.0
    %v1650 = vmax.f32 %v1605, 0.0
    %v1651 = vmax.f32 %v1634, 0.0
    %v1652 = vmax.f32 %v1607, 0.0
    %v1653 = vmax.f32 %v1636, 0.0
    %v1654 = vld [vmem:[%s9] sm:$0xf]
    %v1655 = vld [vmem:[%s9 + $0x4] sm:$0xf]
    %v1656 = vld [vmem:[%s9 + $0x8] sm:$0xf]
    %v1657 = vld [vmem:[%s9 + $0xc] sm:$0xf]
    %v1658 = vld [vmem:[%s9 + $0x10] sm:$0xf]
    %v1659 = vld [vmem:[%s9 + $0x14] sm:$0xf]
    %v1660 = vld [vmem:[%s9 + $0x18] sm:$0xf]
    %v1661 = vld [vmem:[%s9 + $0x1c] sm:$0xf]
    %v1662 = vld [vmem:[%s9 + $0x20] sm:$0xf]
    %v1663 = vld [vmem:[%s9 + $0x24] sm:$0xf]
    %v1664 = vld [vmem:[%s9 + $0x28] sm:$0xf]
    %v1665 = vld [vmem:[%s9 + $0x2c] sm:$0xf]
    %v1666 = vld [vmem:[%s9 + $0x30] sm:$0xf]
    %v1667 = vld [vmem:[%s9 + $0x34] sm:$0xf]
    %v1668 = vld [vmem:[%s9 + $0x38] sm:$0xf]
    %v1669 = vld [vmem:[%s9 + $0x3c] sm:$0xf]
    %v1670 = vpack.c.bf16 %v1640, %v1638
    %v1671 = vpack.c.bf16 %v1641, %v1639
    %v1672 = vpack.c.bf16 %v1644, %v1642
    %v1673 = vpack.c.bf16 %v1645, %v1643
    %v1674 = vpack.c.bf16 %v1648, %v1646
    %v1675 = vpack.c.bf16 %v1649, %v1647
    %v1676 = vpack.c.bf16 %v1652, %v1650
    %v1677 = vpack.c.bf16 %v1653, %v1651
    %v1678 = vld [vmem:[%s10] sm:$0xff]
    %v1679 = vld [vmem:[%s10 + $0x8] sm:$0xff]
    %v1680 = vld [vmem:[%s10 + $0x10] sm:$0xff]
    %v1681 = vld [vmem:[%s10 + $0x18] sm:$0xff]
    %v1682 = vld [vmem:[%s10 + $0x20] sm:$0xff]
    %v1683 = vld [vmem:[%s10 + $0x28] sm:$0xff]
    %v1684 = vld [vmem:[%s10 + $0x30] sm:$0xff]
    %v1685 = vld [vmem:[%s10 + $0x38] sm:$0xff]
    %v1686 = vld [vmem:[%s10 + $0x40] sm:$0xff]
    %v1687 = vld [vmem:[%s10 + $0x48] sm:$0xff]
    %v1688 = vld [vmem:[%s10 + $0x50] sm:$0xff]
    %v1689 = vld [vmem:[%s10 + $0x58] sm:$0xff]
    %v1690 = vld [vmem:[%s10 + $0x60] sm:$0xff]
    %v1691 = vld [vmem:[%s10 + $0x68] sm:$0xff]
    %v1692 = vld [vmem:[%s10 + $0x70] sm:$0xff]
    %v1693 = vld [vmem:[%s10 + $0x78] sm:$0xff]
    %1695 = vset.pattern.permute.xlu0 0
    %1696 = vperm.xlu0 %1695, %v1678
    %v1697 = vpop.permute.xlu0 %1696
    %1700 = vset.pattern.permute.xlu0 0
    %1701 = vperm.xlu0 %1700, %v1679
    %v1702 = vpop.permute.xlu0 %1701
    %1705 = vset.pattern.permute.xlu0 0
    %1706 = vperm.xlu0 %1705, %v1680
    %v1707 = vpop.permute.xlu0 %1706
    %1710 = vset.pattern.permute.xlu0 0
    %1711 = vperm.xlu0 %1710, %v1681
    %v1712 = vpop.permute.xlu0 %1711
    %1715 = vset.pattern.permute.xlu0 0
    %1716 = vperm.xlu0 %1715, %v1682
    %v1717 = vpop.permute.xlu0 %1716
    %1720 = vset.pattern.permute.xlu0 0
    %1721 = vperm.xlu0 %1720, %v1683
    %v1722 = vpop.permute.xlu0 %1721
    %1725 = vset.pattern.permute.xlu0 0
    %1726 = vperm.xlu0 %1725, %v1684
    %v1727 = vpop.permute.xlu0 %1726
    %1730 = vset.pattern.permute.xlu0 0
    %1731 = vperm.xlu0 %1730, %v1685
    %v1732 = vpop.permute.xlu0 %1731
    %1735 = vset.pattern.permute.xlu0 0
    %1736 = vperm.xlu0 %1735, %v1686
    %v1737 = vpop.permute.xlu0 %1736
    %1740 = vset.pattern.permute.xlu0 0
    %1741 = vperm.xlu0 %1740, %v1687
    %v1742 = vpop.permute.xlu0 %1741
    %1745 = vset.pattern.permute.xlu0 0
    %1746 = vperm.xlu0 %1745, %v1688
    %v1747 = vpop.permute.xlu0 %1746
    %1750 = vset.pattern.permute.xlu0 0
    %1751 = vperm.xlu0 %1750, %v1689
    %v1752 = vpop.permute.xlu0 %1751
    %1755 = vset.pattern.permute.xlu0 0
    %1756 = vperm.xlu0 %1755, %v1690
    %v1757 = vpop.permute.xlu0 %1756
    %1760 = vset.pattern.permute.xlu0 0
    %1761 = vperm.xlu0 %1760, %v1691
    %v1762 = vpop.permute.xlu0 %1761
    %1765 = vset.pattern.permute.xlu0 0
    %1766 = vperm.xlu0 %1765, %v1692
    %v1767 = vpop.permute.xlu0 %1766
    %1770 = vset.pattern.permute.xlu0 0
    %1771 = vperm.xlu0 %1770, %v1693
    %v1772 = vpop.permute.xlu0 %1771
    %v1790 = vunpack.c.l.b16 %v1654
    %v1791 = vunpack.c.l.b16 %v1655
    %v1792 = vunpack.c.l.b16 %v1656
    %v1793 = vunpack.c.l.b16 %v1657
    %v1794 = vunpack.c.l.b16 %v1658
    %v1795 = vunpack.c.l.b16 %v1659
    %v1796 = vunpack.c.l.b16 %v1660
    %v1797 = vunpack.c.l.b16 %v1661
    %v1798 = vunpack.c.l.b16 %v1662
    %v1799 = vunpack.c.l.b16 %v1663
    %v1800 = vunpack.c.l.b16 %v1664
    %v1801 = vunpack.c.l.b16 %v1665
    %v1802 = vunpack.c.l.b16 %v1666
    %v1803 = vunpack.c.l.b16 %v1667
    %v1804 = vunpack.c.l.b16 %v1668
    %v1805 = vunpack.c.l.b16 %v1669
    %v1806 = vpack.c.b16 %v1791, %v1790
    %v1807 = vpack.c.b16 %v1793, %v1792
    %v1808 = vpack.c.b16 %v1795, %v1794
    %v1809 = vpack.c.b16 %v1797, %v1796
    %v1810 = vpack.c.b16 %v1799, %v1798
    %v1811 = vpack.c.b16 %v1801, %v1800
    %v1812 = vpack.c.b16 %v1803, %v1802
    %v1813 = vpack.c.b16 %v1805, %v1804
    %v1815 = vsel %vm678, %v1806, 0
    %v1818 = vsel %vm678, %v1807, 0
    %v1821 = vsel %vm678, %v1808, 0
    %v1824 = vsel %vm678, %v1809, 0
    %v1827 = vsel %vm678, %v1810, 0
    %v1830 = vsel %vm678, %v1811, 0
    %v1833 = vsel %vm678, %v1812, 0
    %v1836 = vsel %vm678, %v1813, 0
    %1838 = vmatpush.bf16.msra.mxu0 0
    %1839 = vmatpush.bf16.msra.mxu0 0
    %1840 = vmatpush.bf16.msra.mxu0 0
    %1841 = vmatpush.bf16.msra.mxu0 0
    %1842 = vmatpush.bf16.msra.mxu0 %v1676
    %1843 = vmatpush.bf16.msra.mxu0 %v1674
    %1844 = vmatpush.bf16.msra.mxu0 %v1672
    %1845 = vmatpush.bf16.msra.mxu0 %v1670
    %1846 = vmatmul.bf16.gmra.mxu0 %v1815
    %v1847 = vpop.f32.mrf.mxu0
    %v1848 = vadd.f32 %v1697, %v1847
    %v1849 = vpop.f32.mrf.mxu0
    %v1850 = vadd.f32 %v1702, %v1849
    %1851 = vmatmul.bf16.gmra.mxu0 %v1818
    %v1852 = vpop.f32.mrf.mxu0
    %v1853 = vadd.f32 %v1707, %v1852
    %v1854 = vpop.f32.mrf.mxu0
    %v1855 = vadd.f32 %v1712, %v1854
    %1856 = vmatmul.bf16.gmra.mxu0 %v1821
    %v1857 = vpop.f32.mrf.mxu0
    %v1858 = vadd.f32 %v1717, %v1857
    %v1859 = vpop.f32.mrf.mxu0
    %v1860 = vadd.f32 %v1722, %v1859
    %1861 = vmatmul.bf16.gmra.mxu0 %v1824
    %v1862 = vpop.f32.mrf.mxu0
    %v1863 = vadd.f32 %v1727, %v1862
    %v1864 = vpop.f32.mrf.mxu0
    %v1865 = vadd.f32 %v1732, %v1864
    %1866 = vmatmul.bf16.gmra.mxu0 %v1827
    %v1867 = vpop.f32.mrf.mxu0
    %v1868 = vadd.f32 %v1737, %v1867
    %v1869 = vpop.f32.mrf.mxu0
    %v1870 = vadd.f32 %v1742, %v1869
    %1871 = vmatmul.bf16.gmra.mxu0 %v1830
    %v1872 = vpop.f32.mrf.mxu0
    %v1873 = vadd.f32 %v1747, %v1872
    %v1874 = vpop.f32.mrf.mxu0
    %v1875 = vadd.f32 %v1752, %v1874
    %1876 = vmatmul.bf16.gmra.mxu0 %v1833
    %v1877 = vpop.f32.mrf.mxu0
    %v1878 = vadd.f32 %v1757, %v1877
    %v1879 = vpop.f32.mrf.mxu0
    %v1880 = vadd.f32 %v1762, %v1879
    %1881 = vmatmul.bf16.gmra.mxu0 %v1836
    %v1882 = vpop.f32.mrf.mxu0
    %v1883 = vadd.f32 %v1767, %v1882
    %v1884 = vpop.f32.mrf.mxu0
    %v1885 = vadd.f32 %v1772, %v1884
    %1886 = vdwg.mxu0
    %1887 = vmatpush.bf16.msra.mxu0 0
    %1888 = vmatpush.bf16.msra.mxu0 0
    %1889 = vmatpush.bf16.msra.mxu0 0
    %1890 = vmatpush.bf16.msra.mxu0 0
    %1891 = vmatpush.bf16.msra.mxu0 %v1677
    %1892 = vmatpush.bf16.msra.mxu0 %v1675
    %1893 = vmatpush.bf16.msra.mxu0 %v1673
    %1894 = vmatpush.bf16.msra.mxu0 %v1671
    %1895 = vmatmul.bf16.gmra.mxu0 %v1815
    %v1896 = vpop.f32.mrf.mxu0
    %v1897 = vadd.f32 %v1697, %v1896
    %v1898 = vpop.f32.mrf.mxu0
    %v1899 = vadd.f32 %v1702, %v1898
    %1900 = vmatmul.bf16.gmra.mxu0 %v1818
    %v1901 = vpop.f32.mrf.mxu0
    %v1902 = vadd.f32 %v1707, %v1901
    %v1903 = vpop.f32.mrf.mxu0
    %v1904 = vadd.f32 %v1712, %v1903
    %1905 = vmatmul.bf16.gmra.mxu0 %v1821
    %v1906 = vpop.f32.mrf.mxu0
    %v1907 = vadd.f32 %v1717, %v1906
    %v1908 = vpop.f32.mrf.mxu0
    %v1909 = vadd.f32 %v1722, %v1908
    %1910 = vmatmul.bf16.gmra.mxu0 %v1824
    %v1911 = vpop.f32.mrf.mxu0
    %v1912 = vadd.f32 %v1727, %v1911
    %v1913 = vpop.f32.mrf.mxu0
    %v1914 = vadd.f32 %v1732, %v1913
    %1915 = vmatmul.bf16.gmra.mxu0 %v1827
    %v1916 = vpop.f32.mrf.mxu0
    %v1917 = vadd.f32 %v1737, %v1916
    %v1918 = vpop.f32.mrf.mxu0
    %v1919 = vadd.f32 %v1742, %v1918
    %1920 = vmatmul.bf16.gmra.mxu0 %v1830
    %v1921 = vpop.f32.mrf.mxu0
    %v1922 = vadd.f32 %v1747, %v1921
    %v1923 = vpop.f32.mrf.mxu0
    %v1924 = vadd.f32 %v1752, %v1923
    %1925 = vmatmul.bf16.gmra.mxu0 %v1833
    %v1926 = vpop.f32.mrf.mxu0
    %v1927 = vadd.f32 %v1757, %v1926
    %v1928 = vpop.f32.mrf.mxu0
    %v1929 = vadd.f32 %v1762, %v1928
    %1930 = vmatmul.bf16.gmra.mxu0 %v1836
    %v1931 = vpop.f32.mrf.mxu0
    %v1932 = vadd.f32 %v1767, %v1931
    %v1933 = vpop.f32.mrf.mxu0
    %v1934 = vadd.f32 %v1772, %v1933
    %1935 = vdwg.mxu0
    %v1936 = vmax.f32 %v1848, 0.0
    %v1937 = vmax.f32 %v1897, 0.0
    %v1938 = vmax.f32 %v1850, 0.0
    %v1939 = vmax.f32 %v1899, 0.0
    %v1940 = vmax.f32 %v1853, 0.0
    %v1941 = vmax.f32 %v1902, 0.0
    %v1942 = vmax.f32 %v1855, 0.0
    %v1943 = vmax.f32 %v1904, 0.0
    %v1944 = vmax.f32 %v1858, 0.0
    %v1945 = vmax.f32 %v1907, 0.0
    %v1946 = vmax.f32 %v1860, 0.0
    %v1947 = vmax.f32 %v1909, 0.0
    %v1948 = vmax.f32 %v1863, 0.0
    %v1949 = vmax.f32 %v1912, 0.0
    %v1950 = vmax.f32 %v1865, 0.0
    %v1951 = vmax.f32 %v1914, 0.0
    %v1952 = vmax.f32 %v1868, 0.0
    %v1953 = vmax.f32 %v1917, 0.0
    %v1954 = vmax.f32 %v1870, 0.0
    %v1955 = vmax.f32 %v1919, 0.0
    %v1956 = vmax.f32 %v1873, 0.0
    %v1957 = vmax.f32 %v1922, 0.0
    %v1958 = vmax.f32 %v1875, 0.0
    %v1959 = vmax.f32 %v1924, 0.0
    %v1960 = vmax.f32 %v1878, 0.0
    %v1961 = vmax.f32 %v1927, 0.0
    %v1962 = vmax.f32 %v1880, 0.0
    %v1963 = vmax.f32 %v1929, 0.0
    %v1964 = vmax.f32 %v1883, 0.0
    %v1965 = vmax.f32 %v1932, 0.0
    %v1966 = vmax.f32 %v1885, 0.0
    %v1967 = vmax.f32 %v1934, 0.0
    %v1968 = vld [vmem:[%s11] sm:$0xf]
    %v1969 = vld [vmem:[%s11 + $0x4] sm:$0xf]
    %v1970 = vld [vmem:[%s11 + $0x8] sm:$0xf]
    %v1971 = vld [vmem:[%s11 + $0xc] sm:$0xf]
    %v1972 = vld [vmem:[%s11 + $0x10] sm:$0xf]
    %v1973 = vld [vmem:[%s11 + $0x14] sm:$0xf]
    %v1974 = vld [vmem:[%s11 + $0x18] sm:$0xf]
    %v1975 = vld [vmem:[%s11 + $0x1c] sm:$0xf]
    %v1976 = vpack.c.bf16 %v1938, %v1936
    %v1977 = vpack.c.bf16 %v1939, %v1937
    %v1978 = vpack.c.bf16 %v1942, %v1940
    %v1979 = vpack.c.bf16 %v1943, %v1941
    %v1980 = vpack.c.bf16 %v1946, %v1944
    %v1981 = vpack.c.bf16 %v1947, %v1945
    %v1982 = vpack.c.bf16 %v1950, %v1948
    %v1983 = vpack.c.bf16 %v1951, %v1949
    %v1984 = vpack.c.bf16 %v1954, %v1952
    %v1985 = vpack.c.bf16 %v1955, %v1953
    %v1986 = vpack.c.bf16 %v1958, %v1956
    %v1987 = vpack.c.bf16 %v1959, %v1957
    %v1988 = vpack.c.bf16 %v1962, %v1960
    %v1989 = vpack.c.bf16 %v1963, %v1961
    %v1990 = vpack.c.bf16 %v1966, %v1964
    %v1991 = vpack.c.bf16 %v1967, %v1965
    %v1992 = vld [vmem:[%s12] sm:$0xff]
    %v1993 = vld [vmem:[%s12 + $0x8] sm:$0xff]
    %v1994 = vld [vmem:[%s12 + $0x10] sm:$0xff]
    %v1995 = vld [vmem:[%s12 + $0x18] sm:$0xff]
    %v1996 = vld [vmem:[%s12 + $0x20] sm:$0xff]
    %v1997 = vld [vmem:[%s12 + $0x28] sm:$0xff]
    %v1998 = vld [vmem:[%s12 + $0x30] sm:$0xff]
    %v1999 = vld [vmem:[%s12 + $0x38] sm:$0xff]
    %2001 = vset.pattern.permute.xlu0 0
    %2002 = vperm.xlu0 %2001, %v1992
    %v2003 = vpop.permute.xlu0 %2002
    %2006 = vset.pattern.permute.xlu0 0
    %2007 = vperm.xlu0 %2006, %v1993
    %v2008 = vpop.permute.xlu0 %2007
    %2011 = vset.pattern.permute.xlu0 0
    %2012 = vperm.xlu0 %2011, %v1994
    %v2013 = vpop.permute.xlu0 %2012
    %2016 = vset.pattern.permute.xlu0 0
    %2017 = vperm.xlu0 %2016, %v1995
    %v2018 = vpop.permute.xlu0 %2017
    %2021 = vset.pattern.permute.xlu0 0
    %2022 = vperm.xlu0 %2021, %v1996
    %v2023 = vpop.permute.xlu0 %2022
    %2026 = vset.pattern.permute.xlu0 0
    %2027 = vperm.xlu0 %2026, %v1997
    %v2028 = vpop.permute.xlu0 %2027
    %2031 = vset.pattern.permute.xlu0 0
    %2032 = vperm.xlu0 %2031, %v1998
    %v2033 = vpop.permute.xlu0 %2032
    %2036 = vset.pattern.permute.xlu0 0
    %2037 = vperm.xlu0 %2036, %v1999
    %v2038 = vpop.permute.xlu0 %2037
    %v2048 = vunpack.c.l.b16 %v1968
    %v2049 = vunpack.c.l.b16 %v1969
    %v2050 = vunpack.c.l.b16 %v1970
    %v2051 = vunpack.c.l.b16 %v1971
    %v2052 = vunpack.c.l.b16 %v1972
    %v2053 = vunpack.c.l.b16 %v1973
    %v2054 = vunpack.c.l.b16 %v1974
    %v2055 = vunpack.c.l.b16 %v1975
    %v2056 = vpack.c.b16 %v2049, %v2048
    %v2057 = vpack.c.b16 %v2051, %v2050
    %v2058 = vpack.c.b16 %v2053, %v2052
    %v2059 = vpack.c.b16 %v2055, %v2054
    %2064 = vmatpush.bf16.msra.mxu0 %v1990
    %2065 = vmatpush.bf16.msra.mxu0 %v1988
    %2066 = vmatpush.bf16.msra.mxu0 %v1986
    %2067 = vmatpush.bf16.msra.mxu0 %v1984
    %2068 = vmatpush.bf16.msra.mxu0 %v1982
    %2069 = vmatpush.bf16.msra.mxu0 %v1980
    %2070 = vmatpush.bf16.msra.mxu0 %v1978
    %2071 = vmatpush.bf16.msra.mxu0 %v1976
    %2072 = vmatmul.bf16.gmra.mxu0 %v2056
    %v2073 = vpop.f32.mrf.mxu0
    %v2074 = vadd.f32 %v2003, %v2073
    %v2075 = vpop.f32.mrf.mxu0
    %v2076 = vadd.f32 %v2008, %v2075
    %2077 = vmatmul.bf16.gmra.mxu0 %v2057
    %v2078 = vpop.f32.mrf.mxu0
    %v2079 = vadd.f32 %v2013, %v2078
    %v2080 = vpop.f32.mrf.mxu0
    %v2081 = vadd.f32 %v2018, %v2080
    %2082 = vmatmul.bf16.gmra.mxu0 %v2058
    %v2083 = vpop.f32.mrf.mxu0
    %v2084 = vadd.f32 %v2023, %v2083
    %v2085 = vpop.f32.mrf.mxu0
    %v2086 = vadd.f32 %v2028, %v2085
    %2087 = vmatmul.bf16.gmra.mxu0 %v2059
    %v2088 = vpop.f32.mrf.mxu0
    %v2089 = vadd.f32 %v2033, %v2088
    %v2090 = vpop.f32.mrf.mxu0
    %v2091 = vadd.f32 %v2038, %v2090
    %2092 = vdwg.mxu0
    %2093 = vmatpush.bf16.msra.mxu0 %v1991
    %2094 = vmatpush.bf16.msra.mxu0 %v1989
    %2095 = vmatpush.bf16.msra.mxu0 %v1987
    %2096 = vmatpush.bf16.msra.mxu0 %v1985
    %2097 = vmatpush.bf16.msra.mxu0 %v1983
    %2098 = vmatpush.bf16.msra.mxu0 %v1981
    %2099 = vmatpush.bf16.msra.mxu0 %v1979
    %2100 = vmatpush.bf16.msra.mxu0 %v1977
    %2101 = vmatmul.bf16.gmra.mxu0 %v2056
    %v2102 = vpop.f32.mrf.mxu0
    %v2103 = vadd.f32 %v2003, %v2102
    %v2104 = vpop.f32.mrf.mxu0
    %v2105 = vadd.f32 %v2008, %v2104
    %2106 = vmatmul.bf16.gmra.mxu0 %v2057
    %v2107 = vpop.f32.mrf.mxu0
    %v2108 = vadd.f32 %v2013, %v2107
    %v2109 = vpop.f32.mrf.mxu0
    %v2110 = vadd.f32 %v2018, %v2109
    %2111 = vmatmul.bf16.gmra.mxu0 %v2058
    %v2112 = vpop.f32.mrf.mxu0
    %v2113 = vadd.f32 %v2023, %v2112
    %v2114 = vpop.f32.mrf.mxu0
    %v2115 = vadd.f32 %v2028, %v2114
    %2116 = vmatmul.bf16.gmra.mxu0 %v2059
    %v2117 = vpop.f32.mrf.mxu0
    %v2118 = vadd.f32 %v2033, %v2117
    %v2119 = vpop.f32.mrf.mxu0
    %v2120 = vadd.f32 %v2038, %v2119
    %2121 = vdwg.mxu0
    %v2122 = vmax.f32 %v2074, 0.0
    %v2123 = vmax.f32 %v2103, 0.0
    %v2124 = vmax.f32 %v2076, 0.0
    %v2125 = vmax.f32 %v2105, 0.0
    %v2126 = vmax.f32 %v2079, 0.0
    %v2127 = vmax.f32 %v2108, 0.0
    %v2128 = vmax.f32 %v2081, 0.0
    %v2129 = vmax.f32 %v2110, 0.0
    %v2130 = vmax.f32 %v2084, 0.0
    %v2131 = vmax.f32 %v2113, 0.0
    %v2132 = vmax.f32 %v2086, 0.0
    %v2133 = vmax.f32 %v2115, 0.0
    %v2134 = vmax.f32 %v2089, 0.0
    %v2135 = vmax.f32 %v2118, 0.0
    %v2136 = vmax.f32 %v2091, 0.0
    %v2137 = vmax.f32 %v2120, 0.0
    %v2139 = vsel %vm678, %v1527, 0
    %2141 = vmatpush.msra.mxu0 0.0
    %2142 = vmatpush.msra.mxu0 0.0
    %2143 = vmatpush.msra.mxu0 0.0
    %2144 = vmatpush.msra.mxu0 0.0
    %2145 = vmatpush.msra.mxu0 0.0
    %2146 = vmatpush.msra.mxu0 0.0
    %2147 = vmatpush.msra.mxu0 0.0
    %2148 = vmatpush.msra.mxu0 0.0
    %2149 = vmatpush.msra.mxu0 %v2136
    %2150 = vmatpush.msra.mxu0 %v2134
    %2151 = vmatpush.msra.mxu0 %v2132
    %2152 = vmatpush.msra.mxu0 %v2130
    %2153 = vmatpush.msra.mxu0 %v2128
    %2154 = vmatpush.msra.mxu0 %v2126
    %2155 = vmatpush.msra.mxu0 %v2124
    %2156 = vmatpush.msra.mxu0 %v2122
    %2157 = vmatmul.f32.gmra.mxu0 %v2139
    %v2158 = vpop.f32.mrf.mxu0
    %v2159 = vadd.f32 0.0, %v2158
    %2160 = vdwg.mxu0
    %2161 = vmatpush.msra.mxu0 0.0
    %2162 = vmatpush.msra.mxu0 0.0
    %2163 = vmatpush.msra.mxu0 0.0
    %2164 = vmatpush.msra.mxu0 0.0
    %2165 = vmatpush.msra.mxu0 0.0
    %2166 = vmatpush.msra.mxu0 0.0
    %2167 = vmatpush.msra.mxu0 0.0
    %2168 = vmatpush.msra.mxu0 0.0
    %2169 = vmatpush.msra.mxu0 %v2137
    %2170 = vmatpush.msra.mxu0 %v2135
    %2171 = vmatpush.msra.mxu0 %v2133
    %2172 = vmatpush.msra.mxu0 %v2131
    %2173 = vmatpush.msra.mxu0 %v2129
    %2174 = vmatpush.msra.mxu0 %v2127
    %2175 = vmatpush.msra.mxu0 %v2125
    %2176 = vmatpush.msra.mxu0 %v2123
    %2177 = vmatmul.f32.gmra.mxu0 %v2139
    %v2178 = vpop.f32.mrf.mxu0
    %v2179 = vadd.f32 0.0, %v2178
    %2180 = vdwg.mxu0
    %v2182 = vsel %vm678, %v1526, 0
    %2184 = vmatpush.msra.mxu0 0.0
    %2185 = vmatpush.msra.mxu0 0.0
    %2186 = vmatpush.msra.mxu0 0.0
    %2187 = vmatpush.msra.mxu0 0.0
    %2188 = vmatpush.msra.mxu0 0.0
    %2189 = vmatpush.msra.mxu0 0.0
    %2190 = vmatpush.msra.mxu0 0.0
    %2191 = vmatpush.msra.mxu0 0.0
    %2192 = vmatpush.msra.mxu0 %v1652
    %2193 = vmatpush.msra.mxu0 %v1650
    %2194 = vmatpush.msra.mxu0 %v1648
    %2195 = vmatpush.msra.mxu0 %v1646
    %2196 = vmatpush.msra.mxu0 %v1644
    %2197 = vmatpush.msra.mxu0 %v1642
    %2198 = vmatpush.msra.mxu0 %v1640
    %2199 = vmatpush.msra.mxu0 %v1638
    %2200 = vmatmul.f32.gmra.mxu0 %v2182
    %v2201 = vpop.f32.mrf.mxu0
    %v2202 = vadd.f32 %v2159, %v2201
    %2203 = vdwg.mxu0
    %2204 = vmatpush.msra.mxu0 0.0
    %2205 = vmatpush.msra.mxu0 0.0
    %2206 = vmatpush.msra.mxu0 0.0
    %2207 = vmatpush.msra.mxu0 0.0
    %2208 = vmatpush.msra.mxu0 0.0
    %2209 = vmatpush.msra.mxu0 0.0
    %2210 = vmatpush.msra.mxu0 0.0
    %2211 = vmatpush.msra.mxu0 0.0
    %2212 = vmatpush.msra.mxu0 %v1653
    %2213 = vmatpush.msra.mxu0 %v1651
    %2214 = vmatpush.msra.mxu0 %v1649
    %2215 = vmatpush.msra.mxu0 %v1647
    %2216 = vmatpush.msra.mxu0 %v1645
    %2217 = vmatpush.msra.mxu0 %v1643
    %2218 = vmatpush.msra.mxu0 %v1641
    %2219 = vmatpush.msra.mxu0 %v1639
    %2220 = vmatmul.f32.gmra.mxu0 %v2182
    %v2221 = vpop.f32.mrf.mxu0
    %v2222 = vadd.f32 %v2179, %v2221
    %2223 = vdwg.mxu0
    %v2224 = vmul.f32 %v1638, %v1638
    %v2225 = vmul.f32 %v1639, %v1639
    %v2226 = vmul.f32 %v1640, %v1640
    %v2227 = vmul.f32 %v1641, %v1641
    %v2228 = vmul.f32 %v1642, %v1642
    %v2229 = vmul.f32 %v1643, %v1643
    %v2230 = vmul.f32 %v1644, %v1644
    %v2231 = vmul.f32 %v1645, %v1645
    %v2232 = vmul.f32 %v1646, %v1646
    %v2233 = vmul.f32 %v1647, %v1647
    %v2234 = vmul.f32 %v1648, %v1648
    %v2235 = vmul.f32 %v1649, %v1649
    %v2236 = vmul.f32 %v1650, %v1650
    %v2237 = vmul.f32 %v1651, %v1651
    %v2238 = vmul.f32 %v1652, %v1652
    %v2239 = vmul.f32 %v1653, %v1653
    %v2240 = vadd.f32 %v2224, %v2226
    %v2241 = vadd.f32 %v2240, %v2228
    %v2242 = vadd.f32 %v2241, %v2230
    %v2243 = vadd.f32 %v2242, %v2232
    %v2244 = vadd.f32 %v2243, %v2234
    %v2245 = vadd.f32 %v2244, %v2236
    %v2246 = vadd.f32 %v2245, %v2238
    %v2247 = vrot.slane %v2246, 4
    %v2248 = vadd.f32 %v2246, %v2247
    %v2249 = vrot.slane %v2248, 2
    %v2250 = vadd.f32 %v2248, %v2249
    %v2251 = vrot.slane %v2250, 1
    %v2252 = vadd.f32 %v2250, %v2251
    %v2253 = vadd.f32 %v2225, %v2227
    %v2254 = vadd.f32 %v2253, %v2229
    %v2255 = vadd.f32 %v2254, %v2231
    %v2256 = vadd.f32 %v2255, %v2233
    %v2257 = vadd.f32 %v2256, %v2235
    %v2258 = vadd.f32 %v2257, %v2237
    %v2259 = vadd.f32 %v2258, %v2239
    %v2260 = vrot.slane %v2259, 4
    %v2261 = vadd.f32 %v2259, %v2260
    %v2262 = vrot.slane %v2261, 2
    %v2263 = vadd.f32 %v2261, %v2262
    %v2264 = vrot.slane %v2263, 1
    %v2265 = vadd.f32 %v2263, %v2264
    %v2266 = vmul.f32 %v2122, %v2122
    %v2267 = vmul.f32 %v2123, %v2123
    %v2268 = vmul.f32 %v2124, %v2124
    %v2269 = vmul.f32 %v2125, %v2125
    %v2270 = vmul.f32 %v2126, %v2126
    %v2271 = vmul.f32 %v2127, %v2127
    %v2272 = vmul.f32 %v2128, %v2128
    %v2273 = vmul.f32 %v2129, %v2129
    %v2274 = vmul.f32 %v2130, %v2130
    %v2275 = vmul.f32 %v2131, %v2131
    %v2276 = vmul.f32 %v2132, %v2132
    %v2277 = vmul.f32 %v2133, %v2133
    %v2278 = vmul.f32 %v2134, %v2134
    %v2279 = vmul.f32 %v2135, %v2135
    %v2280 = vmul.f32 %v2136, %v2136
    %v2281 = vmul.f32 %v2137, %v2137
    %v2282 = vadd.f32 %v2266, %v2268
    %v2283 = vadd.f32 %v2282, %v2270
    %v2284 = vadd.f32 %v2283, %v2272
    %v2285 = vadd.f32 %v2284, %v2274
    %v2286 = vadd.f32 %v2285, %v2276
    %v2287 = vadd.f32 %v2286, %v2278
    %v2288 = vadd.f32 %v2287, %v2280
    %v2289 = vrot.slane %v2288, 4
    %v2290 = vadd.f32 %v2288, %v2289
    %v2291 = vrot.slane %v2290, 2
    %v2292 = vadd.f32 %v2290, %v2291
    %v2293 = vrot.slane %v2292, 1
    %v2294 = vadd.f32 %v2292, %v2293
    %v2295 = vadd.f32 %v2267, %v2269
    %v2296 = vadd.f32 %v2295, %v2271
    %v2297 = vadd.f32 %v2296, %v2273
    %v2298 = vadd.f32 %v2297, %v2275
    %v2299 = vadd.f32 %v2298, %v2277
    %v2300 = vadd.f32 %v2299, %v2279
    %v2301 = vadd.f32 %v2300, %v2281
    %v2302 = vrot.slane %v2301, 4
    %v2303 = vadd.f32 %v2301, %v2302
    %v2304 = vrot.slane %v2303, 2
    %v2305 = vadd.f32 %v2303, %v2304
    %v2306 = vrot.slane %v2305, 1
    %v2307 = vadd.f32 %v2305, %v2306
    %v2308 = vadd.f32 %v2252, %v2294
    %v2309 = vadd.f32 %v2265, %v2307
    %v2310 = vmax.f32 %v2308, 1e-16
    %v2311 = vmax.f32 %v2309, 1e-16
    %v2312 = vrsqrt.pop %v2310
    %v2313 = vmul.f32 %v2312, %v2310
    %v2314 = vmul.f32 %v2313, %v2312
    %v2315 = vmul.f32 0.5, %v2314
    %v2316 = vsub.f32 1.5, %v2315
    %v2317 = vmul.f32 %v2312, %v2316
    %vm2318 = vweird.f32 %v2310
    %vm2319 = vweird.f32 %v2312
    %vm2320 = vmor %vm2318, %vm2319
    %v2321 = vsel %vm2320, %v2312, %v2317
    %v2322 = vrsqrt.pop %v2311
    %v2323 = vmul.f32 %v2322, %v2311
    %v2324 = vmul.f32 %v2323, %v2322
    %v2325 = vmul.f32 0.5, %v2324
    %v2326 = vsub.f32 1.5, %v2325
    %v2327 = vmul.f32 %v2322, %v2326
    %vm2328 = vweird.f32 %v2311
    %vm2329 = vweird.f32 %v2322
    %vm2330 = vmor %vm2328, %vm2329
    %v2331 = vsel %vm2330, %v2322, %v2327
    %v2332 = vmul.f32 %v2202, %v2321
    %v2333 = vmul.f32 %v2222, %v2331
    %2334 = vst [vmem:[%s13] sm:$0xff] %v2332
    %2335 = vst [vmem:[%s13 + $0x8] sm:$0xff] %v2333
    %v2338 = vrot.slane %v2332, 7
    %v2339 = vrot.slane %v2333, 7
    %vm2342 = vcmp.gt.f32.partialorder %v2332, %v2338
    %vm2343 = vcmp.gt.f32.partialorder %v2333, %v2339
    %v2344 = vsel %vm2342, %v2332, %v2338
    %v2345 = vsel %vm2343, %v2333, %v2339
    %v2346 = vsel %vm2342, 1, 0
    %v2347 = vsel %vm2343, 1, 0
    %v2350 = vrot.slane %v2344, 7
    %v2351 = vrot.slane %v2345, 7
    %vm2354 = vcmp.gt.f32.partialorder %v2332, %v2350
    %vm2355 = vcmp.gt.f32.partialorder %v2333, %v2351
    %v2356 = vrot.slane %v2346, 7
    %v2357 = vrot.slane %v2347, 7
    %v2358 = vsel %vm2354, 2, %v2356
    %v2359 = vsel %vm2355, 2, %v2357
    %2360 = vst [vmem:[#allocation1] sm:$0xff] %v2358
    %2361 = vst [vmem:[#allocation1 + $0x9] sm:$0xff] %v2359
    %s2362 = scalar_lea.vmem [#allocation1], 2
    %v2363 = vld [vmem:[%s2362] ss:$9 sm:$0xff]
    %v2364 = vlaneseq
    %vm2365 = vcmp.ge.s32.totalorder %v2364, 0
    %vm2366 = vcmp.lt.s32.totalorder %v2364, 256
    %vm2367 = vmand %vm2365, %vm2366
    %2368 = vst.msk [vmem:[#allocation2] sm:$0x3] %vm2367, %v2363
    // Predicated region
    $region54: #{protonet_spct_forward.1} parent=1 // pred_check
      _
    $region55: #{protonet_spct_forward.1} parent=1 // pred_check_branch
      %2370 = sbr.rel (0) target = $region57
    $region56: #{protonet_spct_forward.1} parent=1 // pred_region
      _
    $region57: #{protonet_spct_forward.1} parent=1 // pred_fallthru
      _
    // Predicated region
    $region58: #{protonet_spct_forward.1} parent=1 // pred_check
      _
    $region59: #{protonet_spct_forward.1} parent=1 // pred_check_branch
      %2372 = sbr.rel (0) target = $region61
    $region60: #{protonet_spct_forward.1} parent=1 // pred_region
      %2374 = vsyncadd [#allocation3], 0
      %s2376 = sshll.u32 [#allocation2], 4
      %s2377 = int_to_ptr.vmem [resolvable:$true] %s2376
      %s2378 = sshll.u32 %s14, 4
      %s2379 = int_to_ptr.hbm [resolvable:$true] %s2378
      %2381 = dma.vmem_to_hbm [thread:$0]  %s2377, 32, %s2379, [#allocation3]
    $region61: #{protonet_spct_forward.1} parent=1 // pred_fallthru
      _
    // Predicated region
    $region62: #{protonet_spct_forward.1} parent=1 // pred_check
      _
    $region63: #{protonet_spct_forward.1} parent=1 // pred_check_branch
      %2383 = sbr.rel (0) target = $region65
    $region64: #{protonet_spct_forward.1} parent=1 // pred_region
      _
    $region65: #{protonet_spct_forward.1} parent=1 // pred_fallthru
      _
    // Predicated region
    $region66: #{protonet_spct_forward.1} parent=1 // pred_check
      _
    $region67: #{protonet_spct_forward.1} parent=1 // pred_check_branch
      %2385 = sbr.rel (0) target = $region69
    $region68: #{protonet_spct_forward.1} parent=1 // pred_region
      %2387 = dma.done [#allocation3], 32
    $region69: #{protonet_spct_forward.1} parent=1 // pred_fallthru
      _
    %2388 = vsyncpa [#allocation3], 1

</llo_original>
